<compile_context>
chip_gen: v5e
topology: v5e:2x2
jax: 0.10.0
libtpu: 0.0.40
codegen_flags: <defaults>
</compile_context>

<pallas_src>
import functools
import math

import jax
import jax.numpy as jnp
from jax.experimental import pallas as pl
from jax.experimental.pallas import tpu as pltpu

NEG_INF = -1e30  # large finite negative: avoids exp(-inf - -inf) NaN hazards


def _layer_norm(x, gamma, beta, eps=1e-5):
    mean = jnp.mean(x, axis=-1, keepdims=True)
    var = jnp.mean((x - mean) ** 2, axis=-1, keepdims=True)
    return (x - mean) * jax.lax.rsqrt(var + eps) * gamma + beta


# --------------------- Kernel A: fused latent projections ---------------------
def proj_kernel(q_comp, n_embd, head_size,
                x_ref, wd_ref, qg_ref, qb_ref, kvg_ref, kvb_ref,
                wuq_ref, wukv_ref,
                q_ref, k_ref, v_ref):
    x = x_ref[0]                                                      # (tt, C)
    # Single fused down-projection [W_dq | W_dkv]: one MXU pass over x.
    d = jnp.dot(x, wd_ref[...], preferred_element_type=jnp.float32)   # (tt, dq+dkv)
    cq = _layer_norm(d[:, :q_comp], qg_ref[...], qb_ref[...])
    ckv = _layer_norm(d[:, q_comp:], kvg_ref[...], kvb_ref[...])
    # Up-projections; 1/sqrt(Dh) folded into q here (cheap: (tt,C) once).
    q = jnp.dot(cq.astype(wuq_ref.dtype), wuq_ref[...],
                preferred_element_type=jnp.float32) * (1.0 / math.sqrt(head_size))
    kv = jnp.dot(ckv.astype(wukv_ref.dtype), wukv_ref[...],
                 preferred_element_type=jnp.float32)                  # (tt, 2C)
    q_ref[0] = q.astype(q_ref.dtype)
    k_ref[0] = kv[:, :n_embd].astype(k_ref.dtype)
    v_ref[0] = kv[:, n_embd:].astype(v_ref.dtype)


# --------------------- Kernel B: causal flash attention -----------------------
def flash_kernel(block_q, block_k,
                 q_ref, k_ref, v_ref, o_ref, m_scr, l_scr, acc_scr):
    qi = pl.program_id(2)
    ki = pl.program_id(3)

    @pl.when(ki == 0)
    def _init():
        m_scr[...] = jnp.full(m_scr.shape, NEG_INF, dtype=m_scr.dtype)
        l_scr[...] = jnp.zeros(l_scr.shape, dtype=l_scr.dtype)
        acc_scr[...] = jnp.zeros(acc_scr.shape, dtype=acc_scr.dtype)

    # Causal tile skip (block_q == block_k): tiles strictly above the diagonal
    # contribute nothing — skip their compute entirely.
    @pl.when(ki <= qi)
    def _compute():
        q = q_ref[0].astype(jnp.float32)              # (tq, Dh), pre-scaled
        k = k_ref[0].astype(jnp.float32)              # (tk, Dh)
        v = v_ref[0]
        s = jnp.dot(q, k.T, preferred_element_type=jnp.float32)   # (tq, tk)
        # Causal mask from tile base offsets (only the diagonal tile is partial).
        row = qi * block_q + jax.lax.broadcasted_iota(jnp.int32, s.shape, 0)
        col = ki * block_k + jax.lax.broadcasted_iota(jnp.int32, s.shape, 1)
        s = jnp.where(row >= col, s, NEG_INF)
        m_prev = m_scr[...]
        m_new = jnp.maximum(m_prev, jnp.max(s, axis=-1, keepdims=True))
        alpha = jnp.exp(m_prev - m_new)
        p = jnp.exp(s - m_new)
        l_scr[...] = alpha * l_scr[...] + jnp.sum(p, axis=-1, keepdims=True)
        acc_scr[...] = alpha * acc_scr[...] + jnp.dot(
            p.astype(v.dtype), v, preferred_element_type=jnp.float32)
        m_scr[...] = m_new

    @pl.when(ki == pl.num_programs(3) - 1)
    def _finalize():
        inv_l = pl.reciprocal(l_scr[...], approx=True)   # EUP, off the VALU path
        o_ref[0] = (acc_scr[...] * inv_l).astype(o_ref.dtype)


# --------------------- Kernel C: output projection -----------------------------
def out_proj_kernel(y_ref, wo_ref, o_ref):
    o_ref[0] = jnp.dot(y_ref[0], wo_ref[...],
                       preferred_element_type=jnp.float32).astype(o_ref.dtype)


def _const_spec(arr):
    """Whole-array, grid-invariant BlockSpec (small resident weights)."""
    zeros = (0,) * arr.ndim
    return pl.BlockSpec(arr.shape, lambda *_, _z=zeros: _z)


def mla_forward(x, params, num_heads, *, block_t=None, block_q=None, block_k=None):
    B, T, C = x.shape
    head_size = C // num_heads
    q_comp = params["W_dq"].shape[1]
    dtype = x.dtype

    # Head slices must be lane-aligned for the per-head BlockSpecs.
    assert head_size % 128 == 0 or num_heads == 1, \
        "head_size must be a multiple of 128 (or num_heads == 1)"

    block_t = block_t or min(T, 128)
    block_q = block_q or min(T, 128)
    block_k = block_k or block_q
    assert block_q == block_k, "causal tile-skip assumes square score tiles"
    assert T % block_t == 0 and T % block_q == 0

    # Fused weights (built once at trace time; hoisted by XLA).
    w_d = jnp.concatenate([params["W_dq"], params["W_dkv"]], axis=1)    # (C, dq+dkv)
    w_ukv = jnp.concatenate([params["W_uk"], params["W_uv"]], axis=1)   # (dkv, 2C)

    # ---- Kernel A: projections ------------------------------------------------
    n_t = T // block_t
    row_spec = pl.BlockSpec((1, block_t, C), lambda b, t: (b, t, 0))
    q_full, k_full, v_full = pl.pallas_call(
        functools.partial(proj_kernel, q_comp, C, head_size),
        grid=(B, n_t),
        in_specs=[row_spec, _const_spec(w_d),
                  _const_spec(params["q_ln_g"]), _const_spec(params["q_ln_b"]),
                  _const_spec(params["kv_ln_g"]), _const_spec(params["kv_ln_b"]),
                  _const_spec(params["W_uq"]), _const_spec(w_ukv)],
        out_specs=(row_spec, row_spec, row_spec),
        out_shape=tuple(jax.ShapeDtypeStruct((B, T, C), dtype) for _ in range(3)),
        compiler_params=pltpu.CompilerParams(
            dimension_semantics=("parallel", "parallel")),
    )(x, w_d, params["q_ln_g"], params["q_ln_b"],
      params["kv_ln_g"], params["kv_ln_b"], params["W_uq"], w_ukv)

    # ---- Kernel B: flash attention (heads as a grid axis) ----------------------
    n_q = T // block_q
    n_k = T // block_k
    q_spec = pl.BlockSpec((1, block_q, head_size), lambda b, h, qi, ki: (b, qi, h))
    # Fully-masked kv tiles (ki > qi) are remapped onto the last useful tile so
    # the pipeline does not spend DMA bandwidth fetching data we skip.
    kv_spec = pl.BlockSpec((1, block_k, head_size),
                           lambda b, h, qi, ki: (b, jnp.minimum(ki, qi), h))
    o_spec = pl.BlockSpec((1, block_q, head_size), lambda b, h, qi, ki: (b, qi, h))

    itemsize = jnp.dtype(dtype).itemsize
    cost = pl.CostEstimate(
        flops=2 * B * num_heads * T * T * head_size,       # ~causal half of QK^T + PV
        transcendentals=B * num_heads * T * T // 2,        # exp in online softmax
        bytes_accessed=4 * B * T * C * itemsize)           # q, k, v in + y out

    y = pl.pallas_call(
        functools.partial(flash_kernel, block_q, block_k),
        grid=(B, num_heads, n_q, n_k),
        in_specs=[q_spec, kv_spec, kv_spec],
        out_specs=o_spec,
        out_shape=jax.ShapeDtypeStruct((B, T, C), dtype),
        scratch_shapes=[pltpu.VMEM((block_q, 1), jnp.float32),          # m
                        pltpu.VMEM((block_q, 1), jnp.float32),          # l
                        pltpu.VMEM((block_q, head_size), jnp.float32)],  # acc
        compiler_params=pltpu.CompilerParams(
            dimension_semantics=("parallel", "parallel", "parallel", "arbitrary"),
            vmem_limit_bytes=48 * 1024 * 1024),
        cost_estimate=cost,
    )(q_full, k_full, v_full)

    # ---- Kernel C: output projection -------------------------------------------
    out = pl.pallas_call(
        out_proj_kernel,
        grid=(B, n_t),
        in_specs=[row_spec, _const_spec(params["W_o"])],
        out_specs=row_spec,
        out_shape=jax.ShapeDtypeStruct((B, T, C), dtype),
        compiler_params=pltpu.CompilerParams(
            dimension_semantics=("parallel", "parallel")),
    )(y, params["W_o"])
    return out


def mla_reference(x, params, num_heads):
    """Pure-JAX reference mirroring the PyTorch forward (eval mode)."""
    B, T, C = x.shape
    head_size = C // num_heads
    cq = _layer_norm(x @ params["W_dq"], params["q_ln_g"], params["q_ln_b"])
    q = cq @ params["W_uq"]
    ckv = _layer_norm(x @ params["W_dkv"], params["kv_ln_g"], params["kv_ln_b"])
    k = ckv @ params["W_uk"]
    v = ckv @ params["W_uv"]
    qh = q.reshape(B, T, num_heads, head_size).transpose(0, 2, 1, 3)
    kh = k.reshape(B, T, num_heads, head_size).transpose(0, 2, 1, 3)
    vh = v.reshape(B, T, num_heads, head_size).transpose(0, 2, 1, 3)
    s = jnp.einsum("bhqd,bhkd->bhqk", qh, kh) / math.sqrt(head_size)
    mask = jnp.tril(jnp.ones((T, T), dtype=bool))
    s = jnp.where(mask, s, -jnp.inf)
    p = jax.nn.softmax(s, axis=-1)
    y = jnp.einsum("bhqk,bhkd->bhqd", p, vh)
    y = y.transpose(0, 2, 1, 3).reshape(B, T, C)
    return y @ params["W_o"]


def init_params(key, n_embd, q_comp, kv_comp):
    ks = jax.random.split(key, 6)
    std = 0.02
    return {
        # Linear weights stored already transposed: (in_features, out_features)
        "W_dq":  jax.random.normal(ks[0], (n_embd, q_comp), jnp.float32) * std,
        "W_uq":  jax.random.normal(ks[1], (q_comp, n_embd), jnp.float32) * std,
        "W_dkv": jax.random.normal(ks[2], (n_embd, kv_comp), jnp.float32) * std,
        "W_uk":  jax.random.normal(ks[3], (kv_comp, n_embd), jnp.float32) * std,
        "W_uv":  jax.random.normal(ks[4], (kv_comp, n_embd), jnp.float32) * std,
        "W_o":   jax.random.normal(ks[5], (n_embd, n_embd), jnp.float32) * std,
        # LayerNorm params (PyTorch defaults: gamma=1, beta=0), kept as 2-D rows.
        "q_ln_g":  jnp.ones((1, q_comp), jnp.float32),
        "q_ln_b":  jnp.zeros((1, q_comp), jnp.float32),
        "kv_ln_g": jnp.ones((1, kv_comp), jnp.float32),
        "kv_ln_b": jnp.zeros((1, kv_comp), jnp.float32),
    }


if __name__ == "__main__":
    # Small, module-consistent shapes; head_size = 128 keeps per-head slices
    # lane-aligned (DeepSeek-like) so heads can be a grid axis.
    B, T, C = 2, 16, 512
    num_heads = 4                 # head_size = 128
    q_compression_dim = 128
    kv_compression_dim = 64
    # TODO(synk): attn_dropout / output_dropout are no-ops in eval mode and are not implemented.

    key = jax.random.PRNGKey(0)
    kx, kp = jax.random.split(key)
    x = jax.random.normal(kx, (B, T, C), jnp.float32)
    params = init_params(kp, C, q_compression_dim, kv_compression_dim)

    out = mla_forward(x, params, num_heads, block_t=8, block_q=8, block_k=8)
    out = jax.block_until_ready(out)

    ref = mla_reference(x, params, num_heads)
    assert out.shape == (B, T, C)
    err = float(jnp.max(jnp.abs(out - ref)))
    assert jnp.allclose(out, ref, atol=2e-3, rtol=2e-3), f"max abs err = {err}"
    print("KERNEL_OK")
</pallas_src>

<mosaic_0001>
module attributes {stable_mosaic.version = 11 : i64} {
  func.func @proj_kernel(%arg0: i32, %arg1: i32, %arg2: memref<1x8x512xf32, #tpu.memory_space<vmem>>, %arg3: memref<512x192xf32, #tpu.memory_space<vmem>>, %arg4: memref<1x128xf32, #tpu.memory_space<vmem>>, %arg5: memref<1x128xf32, #tpu.memory_space<vmem>>, %arg6: memref<1x64xf32, #tpu.memory_space<vmem>>, %arg7: memref<1x64xf32, #tpu.memory_space<vmem>>, %arg8: memref<128x512xf32, #tpu.memory_space<vmem>>, %arg9: memref<64x1024xf32, #tpu.memory_space<vmem>>, %arg10: memref<1x8x512xf32, #tpu.memory_space<vmem>>, %arg11: memref<1x8x512xf32, #tpu.memory_space<vmem>>, %arg12: memref<1x8x512xf32, #tpu.memory_space<vmem>>) attributes {dimension_semantics = [#tpu.dimension_semantics<parallel>, #tpu.dimension_semantics<parallel>], iteration_bounds = array<i64: 2, 2>, scalar_prefetch = 0 : i64, scratch_operands = 0 : i64, tpu.core_type = #tpu.core_type<tc>, window_params = [{transform_indices = @transform_0, window_bounds = array<i64: 1, 8, 512>}, {pipeline_mode = #tpu.pipeline_mode<synchronous>, transform_indices = @transform_1, window_bounds = array<i64: 512, 192>}, {pipeline_mode = #tpu.pipeline_mode<synchronous>, transform_indices = @transform_2, window_bounds = array<i64: 1, 128>}, {pipeline_mode = #tpu.pipeline_mode<synchronous>, transform_indices = @transform_3, window_bounds = array<i64: 1, 128>}, {pipeline_mode = #tpu.pipeline_mode<synchronous>, transform_indices = @transform_4, window_bounds = array<i64: 1, 64>}, {pipeline_mode = #tpu.pipeline_mode<synchronous>, transform_indices = @transform_5, window_bounds = array<i64: 1, 64>}, {pipeline_mode = #tpu.pipeline_mode<synchronous>, transform_indices = @transform_6, window_bounds = array<i64: 128, 512>}, {pipeline_mode = #tpu.pipeline_mode<synchronous>, transform_indices = @transform_7, window_bounds = array<i64: 64, 1024>}, {transform_indices = @transform_8, window_bounds = array<i64: 1, 8, 512>}, {transform_indices = @transform_9, window_bounds = array<i64: 1, 8, 512>}, {transform_indices = @transform_10, window_bounds = array<i64: 1, 8, 512>}]} {
    %c0 = arith.constant 0 : index
    %c0_0 = arith.constant 0 : index
    %c0_1 = arith.constant 0 : index
    %0 = vector.load %arg2[%c0, %c0_0, %c0_1] : memref<1x8x512xf32, #tpu.memory_space<vmem>>, vector<1x8x512xf32>
    %1 = vector.shape_cast %0 : vector<1x8x512xf32> to vector<8x512xf32>
    %c0_2 = arith.constant 0 : index
    %c0_3 = arith.constant 0 : index
    %2 = vector.load %arg3[%c0_2, %c0_3] : memref<512x192xf32, #tpu.memory_space<vmem>>, vector<512x192xf32>
    %cst = arith.constant dense<0.000000e+00> : vector<8x192xf32>
    %3 = tpu.matmul %1, %2, %cst {dimension_numbers = #tpu.dot_dimension_numbers<[1], [0], [0], [1], [0, 0, 1, 1], [], []>} : vector<8x512xf32>, vector<512x192xf32>, vector<8x192xf32> -> vector<8x192xf32>
    %4 = vector.extract_strided_slice %3 {offsets = [0, 0], sizes = [8, 128], strides = [1, 1]} : vector<8x192xf32> to vector<8x128xf32>
    %c0_4 = arith.constant 0 : index
    %c0_5 = arith.constant 0 : index
    %5 = vector.load %arg4[%c0_4, %c0_5] : memref<1x128xf32, #tpu.memory_space<vmem>>, vector<1x128xf32>
    %c0_6 = arith.constant 0 : index
    %c0_7 = arith.constant 0 : index
    %6 = vector.load %arg5[%c0_6, %c0_7] : memref<1x128xf32, #tpu.memory_space<vmem>>, vector<1x128xf32>
    %cst_8 = arith.constant dense<0.000000e+00> : vector<8xf32>
    %7 = vector.multi_reduction <add>, %4, %cst_8 [1] : vector<8x128xf32> to vector<8xf32>
    %8 = vector.shape_cast %7 : vector<8xf32> to vector<8x1xf32>
    %cst_9 = arith.constant 1.280000e+02 : f32
    %9 = vector.broadcast %cst_9 : f32 to vector<8x1xf32>
    %10 = arith.divf %8, %9 : vector<8x1xf32>
    %11 = vector.broadcast %10 : vector<8x1xf32> to vector<8x128xf32>
    %12 = arith.subf %4, %11 : vector<8x128xf32>
    %13 = arith.mulf %12, %12 : vector<8x128xf32>
    %cst_10 = arith.constant dense<0.000000e+00> : vector<8xf32>
    %14 = vector.multi_reduction <add>, %13, %cst_10 [1] : vector<8x128xf32> to vector<8xf32>
    %15 = vector.shape_cast %14 : vector<8xf32> to vector<8x1xf32>
    %cst_11 = arith.constant 1.280000e+02 : f32
    %16 = vector.broadcast %cst_11 : f32 to vector<8x1xf32>
    %17 = arith.divf %15, %16 : vector<8x1xf32>
    %18 = vector.broadcast %10 : vector<8x1xf32> to vector<8x128xf32>
    %19 = arith.subf %4, %18 : vector<8x128xf32>
    %cst_12 = arith.constant 9.99999974E-6 : f32
    %20 = vector.broadcast %cst_12 : f32 to vector<8x1xf32>
    %21 = arith.addf %17, %20 : vector<8x1xf32>
    %22 = math.rsqrt %21 : vector<8x1xf32>
    %23 = vector.broadcast %22 : vector<8x1xf32> to vector<8x128xf32>
    %24 = arith.mulf %19, %23 : vector<8x128xf32>
    %25 = vector.broadcast %5 : vector<1x128xf32> to vector<8x128xf32>
    %26 = arith.mulf %24, %25 : vector<8x128xf32>
    %27 = vector.broadcast %6 : vector<1x128xf32> to vector<8x128xf32>
    %28 = arith.addf %26, %27 : vector<8x128xf32>
    %29 = vector.extract_strided_slice %3 {offsets = [0, 128], sizes = [8, 64], strides = [1, 1]} : vector<8x192xf32> to vector<8x64xf32>
    %c0_13 = arith.constant 0 : index
    %c0_14 = arith.constant 0 : index
    %30 = vector.load %arg6[%c0_13, %c0_14] : memref<1x64xf32, #tpu.memory_space<vmem>>, vector<1x64xf32>
    %c0_15 = arith.constant 0 : index
    %c0_16 = arith.constant 0 : index
    %31 = vector.load %arg7[%c0_15, %c0_16] : memref<1x64xf32, #tpu.memory_space<vmem>>, vector<1x64xf32>
    %cst_17 = arith.constant dense<0.000000e+00> : vector<8xf32>
    %32 = vector.multi_reduction <add>, %29, %cst_17 [1] : vector<8x64xf32> to vector<8xf32>
    %33 = vector.shape_cast %32 : vector<8xf32> to vector<8x1xf32>
    %cst_18 = arith.constant 6.400000e+01 : f32
    %34 = vector.broadcast %cst_18 : f32 to vector<8x1xf32>
    %35 = arith.divf %33, %34 : vector<8x1xf32>
    %36 = vector.broadcast %35 : vector<8x1xf32> to vector<8x64xf32>
    %37 = arith.subf %29, %36 : vector<8x64xf32>
    %38 = arith.mulf %37, %37 : vector<8x64xf32>
    %cst_19 = arith.constant dense<0.000000e+00> : vector<8xf32>
    %39 = vector.multi_reduction <add>, %38, %cst_19 [1] : vector<8x64xf32> to vector<8xf32>
    %40 = vector.shape_cast %39 : vector<8xf32> to vector<8x1xf32>
    %cst_20 = arith.constant 6.400000e+01 : f32
    %41 = vector.broadcast %cst_20 : f32 to vector<8x1xf32>
    %42 = arith.divf %40, %41 : vector<8x1xf32>
    %43 = vector.broadcast %35 : vector<8x1xf32> to vector<8x64xf32>
    %44 = arith.subf %29, %43 : vector<8x64xf32>
    %cst_21 = arith.constant 9.99999974E-6 : f32
    %45 = vector.broadcast %cst_21 : f32 to vector<8x1xf32>
    %46 = arith.addf %42, %45 : vector<8x1xf32>
    %47 = math.rsqrt %46 : vector<8x1xf32>
    %48 = vector.broadcast %47 : vector<8x1xf32> to vector<8x64xf32>
    %49 = arith.mulf %44, %48 : vector<8x64xf32>
    %50 = vector.broadcast %30 : vector<1x64xf32> to vector<8x64xf32>
    %51 = arith.mulf %49, %50 : vector<8x64xf32>
    %52 = vector.broadcast %31 : vector<1x64xf32> to vector<8x64xf32>
    %53 = arith.addf %51, %52 : vector<8x64xf32>
    %c0_22 = arith.constant 0 : index
    %c0_23 = arith.constant 0 : index
    %54 = vector.load %arg8[%c0_22, %c0_23] : memref<128x512xf32, #tpu.memory_space<vmem>>, vector<128x512xf32>
    %cst_24 = arith.constant dense<0.000000e+00> : vector<8x512xf32>
    %55 = tpu.matmul %28, %54, %cst_24 {dimension_numbers = #tpu.dot_dimension_numbers<[1], [0], [0], [1], [0, 0, 1, 1], [], []>} : vector<8x128xf32>, vector<128x512xf32>, vector<8x512xf32> -> vector<8x512xf32>
    %cst_25 = arith.constant 0.0883883461 : f32
    %56 = vector.broadcast %cst_25 : f32 to vector<8x512xf32>
    %57 = arith.mulf %55, %56 : vector<8x512xf32>
    %c0_26 = arith.constant 0 : index
    %c0_27 = arith.constant 0 : index
    %58 = vector.load %arg9[%c0_26, %c0_27] : memref<64x1024xf32, #tpu.memory_space<vmem>>, vector<64x1024xf32>
    %cst_28 = arith.constant dense<0.000000e+00> : vector<8x1024xf32>
    %59 = tpu.matmul %53, %58, %cst_28 {dimension_numbers = #tpu.dot_dimension_numbers<[1], [0], [0], [1], [0, 0, 1, 1], [], []>} : vector<8x64xf32>, vector<64x1024xf32>, vector<8x1024xf32> -> vector<8x1024xf32>
    %c0_29 = arith.constant 0 : index
    %c0_30 = arith.constant 0 : index
    %c0_31 = arith.constant 0 : index
    %60 = vector.load %arg10[%c0_29, %c0_30, %c0_31] : memref<1x8x512xf32, #tpu.memory_space<vmem>>, vector<1x8x512xf32>
    %61 = vector.shape_cast %60 : vector<1x8x512xf32> to vector<8x512xf32>
    %62 = vector.shape_cast %57 : vector<8x512xf32> to vector<1x8x512xf32>
    tpu.vector_store %arg10[%c0_29, %c0_30, %c0_31], %62 {strides = array<i32>} : memref<1x8x512xf32, #tpu.memory_space<vmem>>, vector<1x8x512xf32>,
    %63 = vector.extract_strided_slice %59 {offsets = [0, 0], sizes = [8, 512], strides = [1, 1]} : vector<8x1024xf32> to vector<8x512xf32>
    %c0_32 = arith.constant 0 : index
    %c0_33 = arith.constant 0 : index
    %c0_34 = arith.constant 0 : index
    %64 = vector.load %arg11[%c0_32, %c0_33, %c0_34] : memref<1x8x512xf32, #tpu.memory_space<vmem>>, vector<1x8x512xf32>
    %65 = vector.shape_cast %64 : vector<1x8x512xf32> to vector<8x512xf32>
    %66 = vector.shape_cast %63 : vector<8x512xf32> to vector<1x8x512xf32>
    tpu.vector_store %arg11[%c0_32, %c0_33, %c0_34], %66 {strides = array<i32>} : memref<1x8x512xf32, #tpu.memory_space<vmem>>, vector<1x8x512xf32>,
    %67 = vector.extract_strided_slice %59 {offsets = [0, 512], sizes = [8, 512], strides = [1, 1]} : vector<8x1024xf32> to vector<8x512xf32>
    %c0_35 = arith.constant 0 : index
    %c0_36 = arith.constant 0 : index
    %c0_37 = arith.constant 0 : index
    %68 = vector.load %arg12[%c0_35, %c0_36, %c0_37] : memref<1x8x512xf32, #tpu.memory_space<vmem>>, vector<1x8x512xf32>
    %69 = vector.shape_cast %68 : vector<1x8x512xf32> to vector<8x512xf32>
    %70 = vector.shape_cast %67 : vector<8x512xf32> to vector<1x8x512xf32>
    tpu.vector_store %arg12[%c0_35, %c0_36, %c0_37], %70 {strides = array<i32>} : memref<1x8x512xf32, #tpu.memory_space<vmem>>, vector<1x8x512xf32>,
    return
  }
  func.func @transform_0(%arg0: i32, %arg1: i32) -> (i32, i32, i32) {
    %c0_i32 = arith.constant 0 : i32
    %c0_i32_0 = arith.constant 0 : i32
    return %arg0, %arg1, %c0_i32 : i32, i32, i32
  }
  func.func @transform_1(%arg0: i32, %arg1: i32) -> (i32, i32) {
    %c0_i32 = arith.constant 0 : i32
    %c0_i32_0 = arith.constant 0 : i32
    %c0_i32_1 = arith.constant 0 : i32
    return %c0_i32, %c0_i32_0 : i32, i32
  }
  func.func @transform_2(%arg0: i32, %arg1: i32) -> (i32, i32) {
    %c0_i32 = arith.constant 0 : i32
    %c0_i32_0 = arith.constant 0 : i32
    %c0_i32_1 = arith.constant 0 : i32
    return %c0_i32, %c0_i32_0 : i32, i32
  }
  func.func @transform_3(%arg0: i32, %arg1: i32) -> (i32, i32) {
    %c0_i32 = arith.constant 0 : i32
    %c0_i32_0 = arith.constant 0 : i32
    %c0_i32_1 = arith.constant 0 : i32
    return %c0_i32, %c0_i32_0 : i32, i32
  }
  func.func @transform_4(%arg0: i32, %arg1: i32) -> (i32, i32) {
    %c0_i32 = arith.constant 0 : i32
    %c0_i32_0 = arith.constant 0 : i32
    %c0_i32_1 = arith.constant 0 : i32
    return %c0_i32, %c0_i32_0 : i32, i32
  }
  func.func @transform_5(%arg0: i32, %arg1: i32) -> (i32, i32) {
    %c0_i32 = arith.constant 0 : i32
    %c0_i32_0 = arith.constant 0 : i32
    %c0_i32_1 = arith.constant 0 : i32
    return %c0_i32, %c0_i32_0 : i32, i32
  }
  func.func @transform_6(%arg0: i32, %arg1: i32) -> (i32, i32) {
    %c0_i32 = arith.constant 0 : i32
    %c0_i32_0 = arith.constant 0 : i32
    %c0_i32_1 = arith.constant 0 : i32
    return %c0_i32, %c0_i32_0 : i32, i32
  }
  func.func @transform_7(%arg0: i32, %arg1: i32) -> (i32, i32) {
    %c0_i32 = arith.constant 0 : i32
    %c0_i32_0 = arith.constant 0 : i32
    %c0_i32_1 = arith.constant 0 : i32
    return %c0_i32, %c0_i32_0 : i32, i32
  }
  func.func @transform_8(%arg0: i32, %arg1: i32) -> (i32, i32, i32) {
    %c0_i32 = arith.constant 0 : i32
    %c0_i32_0 = arith.constant 0 : i32
    return %arg0, %arg1, %c0_i32 : i32, i32, i32
  }
  func.func @transform_9(%arg0: i32, %arg1: i32) -> (i32, i32, i32) {
    %c0_i32 = arith.constant 0 : i32
    %c0_i32_0 = arith.constant 0 : i32
    return %arg0, %arg1, %c0_i32 : i32, i32, i32
  }
  func.func @transform_10(%arg0: i32, %arg1: i32) -> (i32, i32, i32) {
    %c0_i32 = arith.constant 0 : i32
    %c0_i32_0 = arith.constant 0 : i32
    return %arg0, %arg1, %c0_i32 : i32, i32, i32
  }
}

</mosaic_0001>

<llo_original>
// kernel: tpu_custom_call.1
$region0: #{tpu_custom_call.1}
  #allocation0 [shape = 'u32[]', space=smem, size = 0x4, offset = 0x4, fixed_abs, tag = 'smem constant byte address 0x4 - core index']
  #allocation1 [shape = 'u32[72,128]{1,0:T(1,128)}', space=vmem, size = 0x9000, scoped, tag = 'internal scratch']
  %s0 = inlined_call_operand.vmem [shape: f32[2,16,512], index: 0, kind: input, shape index: {}]
  %s1 = inlined_call_operand.vmem [shape: f32[512,192], index: 1, kind: input, shape index: {}]
  %s2 = inlined_call_operand.vmem [shape: f32[1,128], index: 2, kind: input, shape index: {}]
  %s3 = inlined_call_operand.vmem [shape: f32[1,128], index: 3, kind: input, shape index: {}]
  %s4 = inlined_call_operand.vmem [shape: f32[1,64], index: 4, kind: input, shape index: {}]
  %s5 = inlined_call_operand.vmem [shape: f32[1,64], index: 5, kind: input, shape index: {}]
  %s6 = inlined_call_operand.vmem [shape: f32[128,512], index: 6, kind: input, shape index: {}]
  %s7 = inlined_call_operand.vmem [shape: f32[64,1024], index: 7, kind: input, shape index: {}]
  %s8 = inlined_call_operand.hbm [shape: f32[2,16,512], index: 8, kind: output, shape index: {0}]
  %s9 = inlined_call_operand.hbm [shape: f32[2,16,512], index: 9, kind: output, shape index: {1}]
  %s10 = inlined_call_operand.hbm [shape: f32[2,16,512], index: 10, kind: output, shape index: {2}]
  %11 = xla_tuple %s8, %s9, %s10
  %s12 = sld [smem:[#allocation0]]
  $region81: #{tpu_custom_call.1} parent=0
    _
  %s14 = ssub.s32 1, %s12
  %s15 = scalar_select 0, %s14, %s12
  $region1: #{tpu_custom_call.1} parent=0
    #allocation2 [shape = 'u8[32768]{0}', space=vmem, size = 0x8000, scoped, tag = 'output window, operand 0']
    #allocation3 [shape = 's32[2]{0}', space=sflag, size = 0x8, scoped, tag = 'scoped memory for tpu_custom_call.1']
    #allocation4 [shape = 'u8[32768]{0}', space=vmem, size = 0x8000, scoped, tag = 'output window, operand 1']
    #allocation5 [shape = 's32[2]{0}', space=sflag, size = 0x8, scoped, tag = 'scoped memory for tpu_custom_call.1']
    #allocation6 [shape = 'u8[32768]{0}', space=vmem, size = 0x8000, scoped, tag = 'output window, operand 2']
    %16 = vsyncpa [#allocation3], 0
    %s17 = scalar_lea.sflag [#allocation3], 1
    %18 = vsyncpa %s17, 0
    %19 = vsyncpa [#allocation5], 0
    %s20 = scalar_lea.sflag [#allocation5], 1
    %21 = vsyncpa %s20, 0
    loop: start=0, step=1, limit=6
    $region2: #{tpu_custom_call.1} parent=1 // loop_pre_header
      _
    $region3: #{tpu_custom_call.1} parent=1 // loop_header
      %s23 = sphi 0, %s27
      %p24 = scmp.ge.s32.totalorder %s23, 6
      %s30 = sphi 0, %s42
      %s31 = sphi 0, %s38
      %s32 = sphi 0, %s30
      %s33 = sphi 0, %s31
      %s34 = sphi 0, %s32
      %s35 = sphi 0, %s33
      %s47 = sphi 0, %s49
      %s50 = sphi 0, %s47
      %s51 = sphi 0, %s50
      %s67 = sphi 0, %s51
      %s71 = sphi 0, %s71
      %s73 = sphi 0, %s71
      %s74 = sphi 0, %s73
      %s88 = sphi 0, %s74
      %s92 = sphi 0, %s92
      %s94 = sphi 0, %s92
      %s95 = sphi 0, %s94
      %s109 = sphi 0, %s95
      %s113 = sphi 0, %s113
      %s115 = sphi 0, %s113
      %s116 = sphi 0, %s115
      %s130 = sphi 0, %s116
      %s134 = sphi 0, %s134
      %s136 = sphi 0, %s134
      %s137 = sphi 0, %s136
      %s151 = sphi 0, %s137
      %s155 = sphi 0, %s155
      %s157 = sphi 0, %s155
      %s158 = sphi 0, %s157
      %s172 = sphi 0, %s158
      %s176 = sphi 0, %s176
      %s178 = sphi 0, %s176
      %s179 = sphi 0, %s178
      %s193 = sphi 0, %s179
      %s197 = sphi 0, %s197
      %s199 = sphi 0, %s197
      %s200 = sphi 0, %s199
      %s214 = sphi 0, %s200
      %s222 = sphi 0, %s224
      %s225 = sphi 0, %s222
      %s226 = sphi 0, %s225
      %s242 = sphi 0, %s226
      %s250 = sphi 0, %s252
      %s253 = sphi 0, %s250
      %s254 = sphi 0, %s253
      %s270 = sphi 0, %s254
      %s278 = sphi 0, %s280
      %s281 = sphi 0, %s278
      %s282 = sphi 0, %s281
      %s298 = sphi 0, %s282
    $region4: #{tpu_custom_call.1} parent=1 // loop_header_branch
      %26 = sbr.rel (%p24) target = $region8
    $region5: #{tpu_custom_call.1} parent=1 // loop_body
      %s28 = ssub.s32 %s23, 1
      %s29 = ssub.s32 %s23, 2
      %s36 = sadd.s32 1, %s31
      %p37 = scmp.ge.s32.totalorder %s36, 2
      %s38 = scalar_select %p37, 0, %s36
      %s39 = sadd.s32 1, %s30
      %s40 = scalar_select %p37, %s39, %s30
      %p41 = scmp.ge.s32.totalorder %s40, 2
      %s42 = scalar_select %p41, 0, %s40
      %s43 = ssub.s32 %s30, %s42
      %s44 = ssub.s32 %s31, %s38
      %s45 = sor.u32 %s43, %s44
      %p46 = scmp.eq.s32.totalorder %s45, 0
      %s48 = sadd.s32 %s47, 1
      %s49 = scalar_select %p46, %s47, %s48
      %p52 = pneg %p46
      %p53 = scmp.eq.s32.totalorder %s23, 3
      %p54 = por %p52, %p53
      %p55 = scmp.ne.s32.totalorder %s47, %s50
      %p56 = scmp.eq.s32.totalorder %s23, 0
      %p57 = por %p55, %p56
      %p58 = scmp.ne.s32.totalorder %s47, %s50
      %p59 = scmp.eq.s32.totalorder %s28, 3
      %p60 = por %p58, %p59
      %p61 = scmp.ne.s32.totalorder %s50, %s51
      %p62 = scmp.eq.s32.totalorder %s28, 0
      %p63 = por %p61, %p62
      %p64 = scmp.ne.s32.totalorder %s50, %s51
      %p65 = scmp.eq.s32.totalorder %s29, 3
      %p66 = por %p64, %p65
      %p68 = scmp.ne.s32.totalorder %s51, %s67
      %p69 = scmp.eq.s32.totalorder %s29, 0
      %p70 = por %p68, %p69
      %s72 = sadd.s32 %s71, 1
      %p75 = scmp.eq.s32.totalorder %s23, 3
      %p76 = scmp.ne.s32.totalorder %s71, %s73
      %p77 = scmp.eq.s32.totalorder %s23, 0
      %p78 = por %p76, %p77
      %p79 = scmp.ne.s32.totalorder %s71, %s73
      %p80 = scmp.eq.s32.totalorder %s28, 3
      %p81 = por %p79, %p80
      %p82 = scmp.ne.s32.totalorder %s73, %s74
      %p83 = scmp.eq.s32.totalorder %s28, 0
      %p84 = por %p82, %p83
      %p85 = scmp.ne.s32.totalorder %s73, %s74
      %p86 = scmp.eq.s32.totalorder %s29, 3
      %p87 = por %p85, %p86
      %p89 = scmp.ne.s32.totalorder %s74, %s88
      %p90 = scmp.eq.s32.totalorder %s29, 0
      %p91 = por %p89, %p90
      %s93 = sadd.s32 %s92, 1
      %p96 = scmp.eq.s32.totalorder %s23, 3
      %p97 = scmp.ne.s32.totalorder %s92, %s94
      %p98 = scmp.eq.s32.totalorder %s23, 0
      %p99 = por %p97, %p98
      %p100 = scmp.ne.s32.totalorder %s92, %s94
      %p101 = scmp.eq.s32.totalorder %s28, 3
      %p102 = por %p100, %p101
      %p103 = scmp.ne.s32.totalorder %s94, %s95
      %p104 = scmp.eq.s32.totalorder %s28, 0
      %p105 = por %p103, %p104
      %p106 = scmp.ne.s32.totalorder %s94, %s95
      %p107 = scmp.eq.s32.totalorder %s29, 3
      %p108 = por %p106, %p107
      %p110 = scmp.ne.s32.totalorder %s95, %s109
      %p111 = scmp.eq.s32.totalorder %s29, 0
      %p112 = por %p110, %p111
      %s114 = sadd.s32 %s113, 1
      %p117 = scmp.eq.s32.totalorder %s23, 3
      %p118 = scmp.ne.s32.totalorder %s113, %s115
      %p119 = scmp.eq.s32.totalorder %s23, 0
      %p120 = por %p118, %p119
      %p121 = scmp.ne.s32.totalorder %s113, %s115
      %p122 = scmp.eq.s32.totalorder %s28, 3
      %p123 = por %p121, %p122
      %p124 = scmp.ne.s32.totalorder %s115, %s116
      %p125 = scmp.eq.s32.totalorder %s28, 0
      %p126 = por %p124, %p125
      %p127 = scmp.ne.s32.totalorder %s115, %s116
      %p128 = scmp.eq.s32.totalorder %s29, 3
      %p129 = por %p127, %p128
      %p131 = scmp.ne.s32.totalorder %s116, %s130
      %p132 = scmp.eq.s32.totalorder %s29, 0
      %p133 = por %p131, %p132
      %s135 = sadd.s32 %s134, 1
      %p138 = scmp.eq.s32.totalorder %s23, 3
      %p139 = scmp.ne.s32.totalorder %s134, %s136
      %p140 = scmp.eq.s32.totalorder %s23, 0
      %p141 = por %p139, %p140
      %p142 = scmp.ne.s32.totalorder %s134, %s136
      %p143 = scmp.eq.s32.totalorder %s28, 3
      %p144 = por %p142, %p143
      %p145 = scmp.ne.s32.totalorder %s136, %s137
      %p146 = scmp.eq.s32.totalorder %s28, 0
      %p147 = por %p145, %p146
      %p148 = scmp.ne.s32.totalorder %s136, %s137
      %p149 = scmp.eq.s32.totalorder %s29, 3
      %p150 = por %p148, %p149
      %p152 = scmp.ne.s32.totalorder %s137, %s151
      %p153 = scmp.eq.s32.totalorder %s29, 0
      %p154 = por %p152, %p153
      %s156 = sadd.s32 %s155, 1
      %p159 = scmp.eq.s32.totalorder %s23, 3
      %p160 = scmp.ne.s32.totalorder %s155, %s157
      %p161 = scmp.eq.s32.totalorder %s23, 0
      %p162 = por %p160, %p161
      %p163 = scmp.ne.s32.totalorder %s155, %s157
      %p164 = scmp.eq.s32.totalorder %s28, 3
      %p165 = por %p163, %p164
      %p166 = scmp.ne.s32.totalorder %s157, %s158
      %p167 = scmp.eq.s32.totalorder %s28, 0
      %p168 = por %p166, %p167
      %p169 = scmp.ne.s32.totalorder %s157, %s158
      %p170 = scmp.eq.s32.totalorder %s29, 3
      %p171 = por %p169, %p170
      %p173 = scmp.ne.s32.totalorder %s158, %s172
      %p174 = scmp.eq.s32.totalorder %s29, 0
      %p175 = por %p173, %p174
      %s177 = sadd.s32 %s176, 1
      %p180 = scmp.eq.s32.totalorder %s23, 3
      %p181 = scmp.ne.s32.totalorder %s176, %s178
      %p182 = scmp.eq.s32.totalorder %s23, 0
      %p183 = por %p181, %p182
      %p184 = scmp.ne.s32.totalorder %s176, %s178
      %p185 = scmp.eq.s32.totalorder %s28, 3
      %p186 = por %p184, %p185
      %p187 = scmp.ne.s32.totalorder %s178, %s179
      %p188 = scmp.eq.s32.totalorder %s28, 0
      %p189 = por %p187, %p188
      %p190 = scmp.ne.s32.totalorder %s178, %s179
      %p191 = scmp.eq.s32.totalorder %s29, 3
      %p192 = por %p190, %p191
      %p194 = scmp.ne.s32.totalorder %s179, %s193
      %p195 = scmp.eq.s32.totalorder %s29, 0
      %p196 = por %p194, %p195
      %s198 = sadd.s32 %s197, 1
      %p201 = scmp.eq.s32.totalorder %s23, 3
      %p202 = scmp.ne.s32.totalorder %s197, %s199
      %p203 = scmp.eq.s32.totalorder %s23, 0
      %p204 = por %p202, %p203
      %p205 = scmp.ne.s32.totalorder %s197, %s199
      %p206 = scmp.eq.s32.totalorder %s28, 3
      %p207 = por %p205, %p206
      %p208 = scmp.ne.s32.totalorder %s199, %s200
      %p209 = scmp.eq.s32.totalorder %s28, 0
      %p210 = por %p208, %p209
      %p211 = scmp.ne.s32.totalorder %s199, %s200
      %p212 = scmp.eq.s32.totalorder %s29, 3
      %p213 = por %p211, %p212
      %p215 = scmp.ne.s32.totalorder %s200, %s214
      %p216 = scmp.eq.s32.totalorder %s29, 0
      %p217 = por %p215, %p216
      %s218 = ssub.s32 %s30, %s42
      %s219 = ssub.s32 %s31, %s38
      %s220 = sor.u32 %s218, %s219
      %p221 = scmp.eq.s32.totalorder %s220, 0
      %s223 = sadd.s32 %s222, 1
      %s224 = scalar_select %p221, %s222, %s223
      %p227 = pneg %p221
      %p228 = scmp.eq.s32.totalorder %s23, 3
      %p229 = por %p227, %p228
      %p230 = scmp.ne.s32.totalorder %s222, %s225
      %p231 = scmp.eq.s32.totalorder %s23, 0
      %p232 = por %p230, %p231
      %p233 = scmp.ne.s32.totalorder %s222, %s225
      %p234 = scmp.eq.s32.totalorder %s28, 3
      %p235 = por %p233, %p234
      %p236 = scmp.ne.s32.totalorder %s225, %s226
      %p237 = scmp.eq.s32.totalorder %s28, 0
      %p238 = por %p236, %p237
      %p239 = scmp.ne.s32.totalorder %s225, %s226
      %p240 = scmp.eq.s32.totalorder %s29, 3
      %p241 = por %p239, %p240
      %p243 = scmp.ne.s32.totalorder %s226, %s242
      %p244 = scmp.eq.s32.totalorder %s29, 0
      %p245 = por %p243, %p244
      %s246 = ssub.s32 %s30, %s42
      %s247 = ssub.s32 %s31, %s38
      %s248 = sor.u32 %s246, %s247
      %p249 = scmp.eq.s32.totalorder %s248, 0
      %s251 = sadd.s32 %s250, 1
      %s252 = scalar_select %p249, %s250, %s251
      %p255 = pneg %p249
      %p256 = scmp.eq.s32.totalorder %s23, 3
      %p257 = por %p255, %p256
      %p258 = scmp.ne.s32.totalorder %s250, %s253
      %p259 = scmp.eq.s32.totalorder %s23, 0
      %p260 = por %p258, %p259
      %p261 = scmp.ne.s32.totalorder %s250, %s253
      %p262 = scmp.eq.s32.totalorder %s28, 3
      %p263 = por %p261, %p262
      %p264 = scmp.ne.s32.totalorder %s253, %s254
      %p265 = scmp.eq.s32.totalorder %s28, 0
      %p266 = por %p264, %p265
      %p267 = scmp.ne.s32.totalorder %s253, %s254
      %p268 = scmp.eq.s32.totalorder %s29, 3
      %p269 = por %p267, %p268
      %p271 = scmp.ne.s32.totalorder %s254, %s270
      %p272 = scmp.eq.s32.totalorder %s29, 0
      %p273 = por %p271, %p272
      %s274 = ssub.s32 %s30, %s42
      %s275 = ssub.s32 %s31, %s38
      %s276 = sor.u32 %s274, %s275
      %p277 = scmp.eq.s32.totalorder %s276, 0
      %s279 = sadd.s32 %s278, 1
      %s280 = scalar_select %p277, %s278, %s279
      %p283 = pneg %p277
      %p284 = scmp.eq.s32.totalorder %s23, 3
      %p285 = por %p283, %p284
      %p286 = scmp.ne.s32.totalorder %s278, %s281
      %p287 = scmp.eq.s32.totalorder %s23, 0
      %p288 = por %p286, %p287
      %p289 = scmp.ne.s32.totalorder %s278, %s281
      %p290 = scmp.eq.s32.totalorder %s28, 3
      %p291 = por %p289, %p290
      %p292 = scmp.ne.s32.totalorder %s281, %s282
      %p293 = scmp.eq.s32.totalorder %s28, 0
      %p294 = por %p292, %p293
      %p295 = scmp.ne.s32.totalorder %s281, %s282
      %p296 = scmp.eq.s32.totalorder %s29, 3
      %p297 = por %p295, %p296
      %p299 = scmp.ne.s32.totalorder %s282, %s298
      %p300 = scmp.eq.s32.totalorder %s29, 0
      %p301 = por %p299, %p300
      %p302 = scmp.le.s32.totalorder 1, %s23
      %p303 = scmp.lt.s32.totalorder %s23, 5
      %p304 = pnand %p302, %p303
      %p305 = pneg %p304
      // Predicated region
      $region9: #{tpu_custom_call.1} parent=5 // pred_check
        _
      $region10: #{tpu_custom_call.1} parent=5 // pred_check_branch
        %307 = sbr.rel (%p304) target = $region12
      $region11: #{tpu_custom_call.1} parent=5 // pred_region
        %s308 = ssub.s32 %s23, 1
        // Predicated region
        $region13: #{tpu_custom_call.1} parent=11 // pred_check
          %p309 = pneg %p84
        $region14: #{tpu_custom_call.1} parent=11 // pred_check_branch
          %311 = sbr.rel (%p309) target = $region16
        $region15: #{tpu_custom_call.1} parent=11 // pred_region
          _
        $region16: #{tpu_custom_call.1} parent=11 // pred_fallthru
          _
        // Predicated region
        $region17: #{tpu_custom_call.1} parent=11 // pred_check
          %p312 = pneg %p105
        $region18: #{tpu_custom_call.1} parent=11 // pred_check_branch
          %314 = sbr.rel (%p312) target = $region20
        $region19: #{tpu_custom_call.1} parent=11 // pred_region
          _
        $region20: #{tpu_custom_call.1} parent=11 // pred_fallthru
          _
        // Predicated region
        $region21: #{tpu_custom_call.1} parent=11 // pred_check
          %p315 = pneg %p126
        $region22: #{tpu_custom_call.1} parent=11 // pred_check_branch
          %317 = sbr.rel (%p315) target = $region24
        $region23: #{tpu_custom_call.1} parent=11 // pred_region
          _
        $region24: #{tpu_custom_call.1} parent=11 // pred_fallthru
          _
        // Predicated region
        $region25: #{tpu_custom_call.1} parent=11 // pred_check
          %p318 = pneg %p147
        $region26: #{tpu_custom_call.1} parent=11 // pred_check_branch
          %320 = sbr.rel (%p318) target = $region28
        $region27: #{tpu_custom_call.1} parent=11 // pred_region
          _
        $region28: #{tpu_custom_call.1} parent=11 // pred_fallthru
          _
        // Predicated region
        $region29: #{tpu_custom_call.1} parent=11 // pred_check
          %p321 = pneg %p168
        $region30: #{tpu_custom_call.1} parent=11 // pred_check_branch
          %323 = sbr.rel (%p321) target = $region32
        $region31: #{tpu_custom_call.1} parent=11 // pred_region
          _
        $region32: #{tpu_custom_call.1} parent=11 // pred_fallthru
          _
        // Predicated region
        $region33: #{tpu_custom_call.1} parent=11 // pred_check
          %p324 = pneg %p189
        $region34: #{tpu_custom_call.1} parent=11 // pred_check_branch
          %326 = sbr.rel (%p324) target = $region36
        $region35: #{tpu_custom_call.1} parent=11 // pred_region
          _
        $region36: #{tpu_custom_call.1} parent=11 // pred_fallthru
          _
        // Predicated region
        $region37: #{tpu_custom_call.1} parent=11 // pred_check
          %p327 = pneg %p210
        $region38: #{tpu_custom_call.1} parent=11 // pred_check_branch
          %329 = sbr.rel (%p327) target = $region40
        $region39: #{tpu_custom_call.1} parent=11 // pred_region
          _
        $region40: #{tpu_custom_call.1} parent=11 // pred_fallthru
          _
      $region12: #{tpu_custom_call.1} parent=5 // pred_fallthru
        _
      %p330 = scmp.lt.s32.totalorder %s23, 4
      // Predicated region
      $region41: #{tpu_custom_call.1} parent=5 // pred_check
        %p331 = pneg %p330
      $region42: #{tpu_custom_call.1} parent=5 // pred_check_branch
        %333 = sbr.rel (%p331) target = $region44
      $region43: #{tpu_custom_call.1} parent=5 // pred_region
        // Predicated region
        $region45: #{tpu_custom_call.1} parent=43 // pred_check
          %p334 = pneg %p57
        $region46: #{tpu_custom_call.1} parent=43 // pred_check_branch
          %336 = sbr.rel (%p334) target = $region48
        $region47: #{tpu_custom_call.1} parent=43 // pred_region
          %p337 = scmp.lt.s32.totalorder %s30, 1
          %s338 = scalar_select %p337, %s30, 1
          %p339 = scmp.lt.s32.totalorder %s31, 1
          %s340 = scalar_select %p339, %s31, 1
          %s341 = smul.addr %s340, 4
          %s342 = smul.addr %s338, 8
          %s343 = sadd.s32 %s341, %s342
          %s344 = smul.addr %s343, 8
          %s345 = scalar_lea.vmem %s0, %s344
        $region48: #{tpu_custom_call.1} parent=43 // pred_fallthru
          _
      $region44: #{tpu_custom_call.1} parent=5 // pred_fallthru
        _
      %p346 = scmp.le.s32.totalorder 1, %s23
      %p347 = scmp.lt.s32.totalorder %s23, 5
      %p348 = pnand %p346, %p347
      %p349 = pneg %p348
      // Predicated region
      $region49: #{tpu_custom_call.1} parent=5 // pred_check
        _
      $region50: #{tpu_custom_call.1} parent=5 // pred_check_branch
        %351 = sbr.rel (%p348) target = $region52
      $region51: #{tpu_custom_call.1} parent=5 // pred_region
        %s352 = ssub.s32 %s23, 1
        %p353 = scmp.lt.s32.totalorder %s32, 1
        %s354 = scalar_select %p353, %s32, 1
        %p355 = scmp.lt.s32.totalorder %s33, 1
        %s356 = scalar_select %p355, %s33, 1
        %s357 = smul.addr %s356, 4
        %s358 = smul.addr %s354, 8
        %s359 = sadd.s32 %s357, %s358
        %s360 = smul.addr %s359, 8
        %s361 = scalar_lea.vmem %s0, %s360
        %p362 = pneg %p63
        %p363 = pneg %p60
        %p364 = pneg %p84
        %p365 = pneg %p81
        %p366 = pneg %p105
        %p367 = pneg %p102
        %p368 = pneg %p126
        %p369 = pneg %p123
        %p370 = pneg %p147
        %p371 = pneg %p144
        %p372 = pneg %p168
        %p373 = pneg %p165
        %p374 = pneg %p189
        %p375 = pneg %p186
        %p376 = pneg %p210
        %p377 = pneg %p207
        %p378 = pneg %p238
        %p379 = pneg %p235
        %s380 = sand.u32 %s225, 1
        %s381 = scalar_lea.sflag [#allocation3], %s380
        %s382 = sand.u32 %s225, 1
        %s383 = smul.addr %s382, 32
        %s384 = scalar_lea.vmem [#allocation2], %s383
        %p385 = pneg %p266
        %p386 = pneg %p263
        %s387 = sand.u32 %s28, 1
        %s388 = scalar_lea.sflag [#allocation5], %s387
        %s389 = sand.u32 %s253, 1
        %s390 = smul.addr %s389, 32
        %s391 = scalar_lea.vmem [#allocation4], %s390
        %p392 = pneg %p294
        %p393 = pneg %p291
        %s394 = sand.u32 %s28, 1
        %s395 = scalar_lea.sflag [#allocation5], %s394
        %s396 = sand.u32 %s281, 1
        %s397 = smul.addr %s396, 32
        %s398 = scalar_lea.vmem [#allocation6], %s397
        %p399 = scmp.lt.s32.totalorder %s32, 1
        %s400 = scalar_select %p399, %s32, 1
        %p401 = scmp.lt.s32.totalorder %s33, 1
        %s402 = scalar_select %p401, %s33, 1
        %s403 = smul.addr %s402, 4
        %s404 = smul.addr %s400, 8
        %s405 = sadd.s32 %s403, %s404
        %s406 = smul.addr %s405, 8
        %s407 = scalar_lea.vmem %s0, %s406
        %v408 = vld [vmem:[%s407] sm:$0xff]
        %v409 = vld [vmem:[%s407 + $0x8] sm:$0xff]
        %v410 = vld [vmem:[%s407 + $0x10] sm:$0xff]
        %v411 = vld [vmem:[%s407 + $0x18] sm:$0xff]
        %v412 = vld [vmem:[%s1] sm:$0xff]
        %v413 = vld [vmem:[%s1 + $0x8] sm:$0xff]
        %v414 = vld [vmem:[%s1 + $0x10] sm:$0xff]
        %v415 = vld [vmem:[%s1 + $0x18] sm:$0xff]
        %v416 = vld [vmem:[%s1 + $0x20] sm:$0xff]
        %v417 = vld [vmem:[%s1 + $0x28] sm:$0xff]
        %v418 = vld [vmem:[%s1 + $0x30] sm:$0xff]
        %v419 = vld [vmem:[%s1 + $0x38] sm:$0xff]
        %v420 = vld [vmem:[%s1 + $0x40] sm:$0xff]
        %v421 = vld [vmem:[%s1 + $0x48] sm:$0xff]
        %v422 = vld [vmem:[%s1 + $0x50] sm:$0xff]
        %v423 = vld [vmem:[%s1 + $0x58] sm:$0xff]
        %v424 = vld [vmem:[%s1 + $0x60] sm:$0xff]
        %v425 = vld [vmem:[%s1 + $0x68] sm:$0xff]
        %v426 = vld [vmem:[%s1 + $0x70] sm:$0xff]
        %v427 = vld [vmem:[%s1 + $0x78] sm:$0xff]
        %v428 = vld [vmem:[%s1 + $0x80] sm:$0xff]
        %v429 = vld [vmem:[%s1 + $0x88] sm:$0xff]
        %v430 = vld [vmem:[%s1 + $0x90] sm:$0xff]
        %v431 = vld [vmem:[%s1 + $0x98] sm:$0xff]
        %v432 = vld [vmem:[%s1 + $0xa0] sm:$0xff]
        %v433 = vld [vmem:[%s1 + $0xa8] sm:$0xff]
        %v434 = vld [vmem:[%s1 + $0xb0] sm:$0xff]
        %v435 = vld [vmem:[%s1 + $0xb8] sm:$0xff]
        %v436 = vld [vmem:[%s1 + $0xc0] sm:$0xff]
        %v437 = vld [vmem:[%s1 + $0xc8] sm:$0xff]
        %v438 = vld [vmem:[%s1 + $0xd0] sm:$0xff]
        %v439 = vld [vmem:[%s1 + $0xd8] sm:$0xff]
        %v440 = vld [vmem:[%s1 + $0xe0] sm:$0xff]
        %v441 = vld [vmem:[%s1 + $0xe8] sm:$0xff]
        %v442 = vld [vmem:[%s1 + $0xf0] sm:$0xff]
        %v443 = vld [vmem:[%s1 + $0xf8] sm:$0xff]
        %v444 = vld [vmem:[%s1 + $0x100] sm:$0xff]
        %v445 = vld [vmem:[%s1 + $0x108] sm:$0xff]
        %v446 = vld [vmem:[%s1 + $0x110] sm:$0xff]
        %v447 = vld [vmem:[%s1 + $0x118] sm:$0xff]
        %v448 = vld [vmem:[%s1 + $0x120] sm:$0xff]
        %v449 = vld [vmem:[%s1 + $0x128] sm:$0xff]
        %v450 = vld [vmem:[%s1 + $0x130] sm:$0xff]
        %v451 = vld [vmem:[%s1 + $0x138] sm:$0xff]
        %v452 = vld [vmem:[%s1 + $0x140] sm:$0xff]
        %v453 = vld [vmem:[%s1 + $0x148] sm:$0xff]
        %v454 = vld [vmem:[%s1 + $0x150] sm:$0xff]
        %v455 = vld [vmem:[%s1 + $0x158] sm:$0xff]
        %v456 = vld [vmem:[%s1 + $0x160] sm:$0xff]
        %v457 = vld [vmem:[%s1 + $0x168] sm:$0xff]
        %v458 = vld [vmem:[%s1 + $0x170] sm:$0xff]
        %v459 = vld [vmem:[%s1 + $0x178] sm:$0xff]
        %v460 = vld [vmem:[%s1 + $0x180] sm:$0xff]
        %v461 = vld [vmem:[%s1 + $0x188] sm:$0xff]
        %v462 = vld [vmem:[%s1 + $0x190] sm:$0xff]
        %v463 = vld [vmem:[%s1 + $0x198] sm:$0xff]
        %v464 = vld [vmem:[%s1 + $0x1a0] sm:$0xff]
        %v465 = vld [vmem:[%s1 + $0x1a8] sm:$0xff]
        %v466 = vld [vmem:[%s1 + $0x1b0] sm:$0xff]
        %v467 = vld [vmem:[%s1 + $0x1b8] sm:$0xff]
        %v468 = vld [vmem:[%s1 + $0x1c0] sm:$0xff]
        %v469 = vld [vmem:[%s1 + $0x1c8] sm:$0xff]
        %v470 = vld [vmem:[%s1 + $0x1d0] sm:$0xff]
        %v471 = vld [vmem:[%s1 + $0x1d8] sm:$0xff]
        %v472 = vld [vmem:[%s1 + $0x1e0] sm:$0xff]
        %v473 = vld [vmem:[%s1 + $0x1e8] sm:$0xff]
        %v474 = vld [vmem:[%s1 + $0x1f0] sm:$0xff]
        %v475 = vld [vmem:[%s1 + $0x1f8] sm:$0xff]
        %v476 = vld [vmem:[%s1 + $0x200] sm:$0xff]
        %v477 = vld [vmem:[%s1 + $0x208] sm:$0xff]
        %v478 = vld [vmem:[%s1 + $0x210] sm:$0xff]
        %v479 = vld [vmem:[%s1 + $0x218] sm:$0xff]
        %v480 = vld [vmem:[%s1 + $0x220] sm:$0xff]
        %v481 = vld [vmem:[%s1 + $0x228] sm:$0xff]
        %v482 = vld [vmem:[%s1 + $0x230] sm:$0xff]
        %v483 = vld [vmem:[%s1 + $0x238] sm:$0xff]
        %v484 = vld [vmem:[%s1 + $0x240] sm:$0xff]
        %v485 = vld [vmem:[%s1 + $0x248] sm:$0xff]
        %v486 = vld [vmem:[%s1 + $0x250] sm:$0xff]
        %v487 = vld [vmem:[%s1 + $0x258] sm:$0xff]
        %v488 = vld [vmem:[%s1 + $0x260] sm:$0xff]
        %v489 = vld [vmem:[%s1 + $0x268] sm:$0xff]
        %v490 = vld [vmem:[%s1 + $0x270] sm:$0xff]
        %v491 = vld [vmem:[%s1 + $0x278] sm:$0xff]
        %v492 = vld [vmem:[%s1 + $0x280] sm:$0xff]
        %v493 = vld [vmem:[%s1 + $0x288] sm:$0xff]
        %v494 = vld [vmem:[%s1 + $0x290] sm:$0xff]
        %v495 = vld [vmem:[%s1 + $0x298] sm:$0xff]
        %v496 = vld [vmem:[%s1 + $0x2a0] sm:$0xff]
        %v497 = vld [vmem:[%s1 + $0x2a8] sm:$0xff]
        %v498 = vld [vmem:[%s1 + $0x2b0] sm:$0xff]
        %v499 = vld [vmem:[%s1 + $0x2b8] sm:$0xff]
        %v500 = vld [vmem:[%s1 + $0x2c0] sm:$0xff]
        %v501 = vld [vmem:[%s1 + $0x2c8] sm:$0xff]
        %v502 = vld [vmem:[%s1 + $0x2d0] sm:$0xff]
        %v503 = vld [vmem:[%s1 + $0x2d8] sm:$0xff]
        %v504 = vld [vmem:[%s1 + $0x2e0] sm:$0xff]
        %v505 = vld [vmem:[%s1 + $0x2e8] sm:$0xff]
        %v506 = vld [vmem:[%s1 + $0x2f0] sm:$0xff]
        %v507 = vld [vmem:[%s1 + $0x2f8] sm:$0xff]
        %v508 = vld [vmem:[%s1 + $0x300] sm:$0xff]
        %v509 = vld [vmem:[%s1 + $0x308] sm:$0xff]
        %v510 = vld [vmem:[%s1 + $0x310] sm:$0xff]
        %v511 = vld [vmem:[%s1 + $0x318] sm:$0xff]
        %v512 = vld [vmem:[%s1 + $0x320] sm:$0xff]
        %v513 = vld [vmem:[%s1 + $0x328] sm:$0xff]
        %v514 = vld [vmem:[%s1 + $0x330] sm:$0xff]
        %v515 = vld [vmem:[%s1 + $0x338] sm:$0xff]
        %v516 = vld [vmem:[%s1 + $0x340] sm:$0xff]
        %v517 = vld [vmem:[%s1 + $0x348] sm:$0xff]
        %v518 = vld [vmem:[%s1 + $0x350] sm:$0xff]
        %v519 = vld [vmem:[%s1 + $0x358] sm:$0xff]
        %v520 = vld [vmem:[%s1 + $0x360] sm:$0xff]
        %v521 = vld [vmem:[%s1 + $0x368] sm:$0xff]
        %v522 = vld [vmem:[%s1 + $0x370] sm:$0xff]
        %v523 = vld [vmem:[%s1 + $0x378] sm:$0xff]
        %v524 = vld [vmem:[%s1 + $0x380] sm:$0xff]
        %v525 = vld [vmem:[%s1 + $0x388] sm:$0xff]
        %v526 = vld [vmem:[%s1 + $0x390] sm:$0xff]
        %v527 = vld [vmem:[%s1 + $0x398] sm:$0xff]
        %v528 = vld [vmem:[%s1 + $0x3a0] sm:$0xff]
        %v529 = vld [vmem:[%s1 + $0x3a8] sm:$0xff]
        %v530 = vld [vmem:[%s1 + $0x3b0] sm:$0xff]
        %v531 = vld [vmem:[%s1 + $0x3b8] sm:$0xff]
        %v532 = vld [vmem:[%s1 + $0x3c0] sm:$0xff]
        %v533 = vld [vmem:[%s1 + $0x3c8] sm:$0xff]
        %v534 = vld [vmem:[%s1 + $0x3d0] sm:$0xff]
        %v535 = vld [vmem:[%s1 + $0x3d8] sm:$0xff]
        %v536 = vld [vmem:[%s1 + $0x3e0] sm:$0xff]
        %v537 = vld [vmem:[%s1 + $0x3e8] sm:$0xff]
        %v538 = vld [vmem:[%s1 + $0x3f0] sm:$0xff]
        %v539 = vld [vmem:[%s1 + $0x3f8] sm:$0xff]
        %540 = vmatpush.msra.mxu0 %v442
        %541 = vmatpush.msra.mxu0 %v440
        %542 = vmatpush.msra.mxu0 %v438
        %543 = vmatpush.msra.mxu0 %v436
        %544 = vmatpush.msra.mxu0 %v434
        %545 = vmatpush.msra.mxu0 %v432
        %546 = vmatpush.msra.mxu0 %v430
        %547 = vmatpush.msra.mxu0 %v428
        %548 = vmatpush.msra.mxu0 %v426
        %549 = vmatpush.msra.mxu0 %v424
        %550 = vmatpush.msra.mxu0 %v422
        %551 = vmatpush.msra.mxu0 %v420
        %552 = vmatpush.msra.mxu0 %v418
        %553 = vmatpush.msra.mxu0 %v416
        %554 = vmatpush.msra.mxu0 %v414
        %555 = vmatpush.msra.mxu0 %v412
        %556 = vmatmul.f32.gmra.mxu0 %v408
        %v557 = vpop.f32.mrf.mxu0
        %v558 = vadd.f32 0.0, %v557
        %559 = vdwg.mxu0
        %560 = vmatpush.msra.mxu0 %v474
        %561 = vmatpush.msra.mxu0 %v472
        %562 = vmatpush.msra.mxu0 %v470
        %563 = vmatpush.msra.mxu0 %v468
        %564 = vmatpush.msra.mxu0 %v466
        %565 = vmatpush.msra.mxu0 %v464
        %566 = vmatpush.msra.mxu0 %v462
        %567 = vmatpush.msra.mxu0 %v460
        %568 = vmatpush.msra.mxu0 %v458
        %569 = vmatpush.msra.mxu0 %v456
        %570 = vmatpush.msra.mxu0 %v454
        %571 = vmatpush.msra.mxu0 %v452
        %572 = vmatpush.msra.mxu0 %v450
        %573 = vmatpush.msra.mxu0 %v448
        %574 = vmatpush.msra.mxu0 %v446
        %575 = vmatpush.msra.mxu0 %v444
        %576 = vmatmul.f32.gmra.mxu0 %v409
        %v577 = vpop.f32.mrf.mxu0
        %v578 = vadd.f32 %v558, %v577
        %579 = vdwg.mxu0
        %580 = vmatpush.msra.mxu0 %v506
        %581 = vmatpush.msra.mxu0 %v504
        %582 = vmatpush.msra.mxu0 %v502
        %583 = vmatpush.msra.mxu0 %v500
        %584 = vmatpush.msra.mxu0 %v498
        %585 = vmatpush.msra.mxu0 %v496
        %586 = vmatpush.msra.mxu0 %v494
        %587 = vmatpush.msra.mxu0 %v492
        %588 = vmatpush.msra.mxu0 %v490
        %589 = vmatpush.msra.mxu0 %v488
        %590 = vmatpush.msra.mxu0 %v486
        %591 = vmatpush.msra.mxu0 %v484
        %592 = vmatpush.msra.mxu0 %v482
        %593 = vmatpush.msra.mxu0 %v480
        %594 = vmatpush.msra.mxu0 %v478
        %595 = vmatpush.msra.mxu0 %v476
        %596 = vmatmul.f32.gmra.mxu0 %v410
        %v597 = vpop.f32.mrf.mxu0
        %v598 = vadd.f32 %v578, %v597
        %599 = vdwg.mxu0
        %600 = vmatpush.msra.mxu0 %v538
        %601 = vmatpush.msra.mxu0 %v536
        %602 = vmatpush.msra.mxu0 %v534
        %603 = vmatpush.msra.mxu0 %v532
        %604 = vmatpush.msra.mxu0 %v530
        %605 = vmatpush.msra.mxu0 %v528
        %606 = vmatpush.msra.mxu0 %v526
        %607 = vmatpush.msra.mxu0 %v524
        %608 = vmatpush.msra.mxu0 %v522
        %609 = vmatpush.msra.mxu0 %v520
        %610 = vmatpush.msra.mxu0 %v518
        %611 = vmatpush.msra.mxu0 %v516
        %612 = vmatpush.msra.mxu0 %v514
        %613 = vmatpush.msra.mxu0 %v512
        %614 = vmatpush.msra.mxu0 %v510
        %615 = vmatpush.msra.mxu0 %v508
        %616 = vmatmul.f32.gmra.mxu0 %v411
        %v617 = vpop.f32.mrf.mxu0
        %v618 = vadd.f32 %v598, %v617
        %619 = vdwg.mxu0
        %620 = vmatpush.msra.mxu0 %v443
        %621 = vmatpush.msra.mxu0 %v441
        %622 = vmatpush.msra.mxu0 %v439
        %623 = vmatpush.msra.mxu0 %v437
        %624 = vmatpush.msra.mxu0 %v435
        %625 = vmatpush.msra.mxu0 %v433
        %626 = vmatpush.msra.mxu0 %v431
        %627 = vmatpush.msra.mxu0 %v429
        %628 = vmatpush.msra.mxu0 %v427
        %629 = vmatpush.msra.mxu0 %v425
        %630 = vmatpush.msra.mxu0 %v423
        %631 = vmatpush.msra.mxu0 %v421
        %632 = vmatpush.msra.mxu0 %v419
        %633 = vmatpush.msra.mxu0 %v417
        %634 = vmatpush.msra.mxu0 %v415
        %635 = vmatpush.msra.mxu0 %v413
        %636 = vmatmul.f32.gmra.mxu0 %v408
        %v637 = vpop.f32.mrf.mxu0
        %v638 = vadd.f32 0.0, %v637
        %639 = vdwg.mxu0
        %640 = vmatpush.msra.mxu0 %v475
        %641 = vmatpush.msra.mxu0 %v473
        %642 = vmatpush.msra.mxu0 %v471
        %643 = vmatpush.msra.mxu0 %v469
        %644 = vmatpush.msra.mxu0 %v467
        %645 = vmatpush.msra.mxu0 %v465
        %646 = vmatpush.msra.mxu0 %v463
        %647 = vmatpush.msra.mxu0 %v461
        %648 = vmatpush.msra.mxu0 %v459
        %649 = vmatpush.msra.mxu0 %v457
        %650 = vmatpush.msra.mxu0 %v455
        %651 = vmatpush.msra.mxu0 %v453
        %652 = vmatpush.msra.mxu0 %v451
        %653 = vmatpush.msra.mxu0 %v449
        %654 = vmatpush.msra.mxu0 %v447
        %655 = vmatpush.msra.mxu0 %v445
        %656 = vmatmul.f32.gmra.mxu0 %v409
        %v657 = vpop.f32.mrf.mxu0
        %v658 = vadd.f32 %v638, %v657
        %659 = vdwg.mxu0
        %660 = vmatpush.msra.mxu0 %v507
        %661 = vmatpush.msra.mxu0 %v505
        %662 = vmatpush.msra.mxu0 %v503
        %663 = vmatpush.msra.mxu0 %v501
        %664 = vmatpush.msra.mxu0 %v499
        %665 = vmatpush.msra.mxu0 %v497
        %666 = vmatpush.msra.mxu0 %v495
        %667 = vmatpush.msra.mxu0 %v493
        %668 = vmatpush.msra.mxu0 %v491
        %669 = vmatpush.msra.mxu0 %v489
        %670 = vmatpush.msra.mxu0 %v487
        %671 = vmatpush.msra.mxu0 %v485
        %672 = vmatpush.msra.mxu0 %v483
        %673 = vmatpush.msra.mxu0 %v481
        %674 = vmatpush.msra.mxu0 %v479
        %675 = vmatpush.msra.mxu0 %v477
        %676 = vmatmul.f32.gmra.mxu0 %v410
        %v677 = vpop.f32.mrf.mxu0
        %v678 = vadd.f32 %v658, %v677
        %679 = vdwg.mxu0
        %680 = vmatpush.msra.mxu0 %v539
        %681 = vmatpush.msra.mxu0 %v537
        %682 = vmatpush.msra.mxu0 %v535
        %683 = vmatpush.msra.mxu0 %v533
        %684 = vmatpush.msra.mxu0 %v531
        %685 = vmatpush.msra.mxu0 %v529
        %686 = vmatpush.msra.mxu0 %v527
        %687 = vmatpush.msra.mxu0 %v525
        %688 = vmatpush.msra.mxu0 %v523
        %689 = vmatpush.msra.mxu0 %v521
        %690 = vmatpush.msra.mxu0 %v519
        %691 = vmatpush.msra.mxu0 %v517
        %692 = vmatpush.msra.mxu0 %v515
        %693 = vmatpush.msra.mxu0 %v513
        %694 = vmatpush.msra.mxu0 %v511
        %695 = vmatpush.msra.mxu0 %v509
        %696 = vmatmul.f32.gmra.mxu0 %v411
        %v697 = vpop.f32.mrf.mxu0
        %v698 = vadd.f32 %v678, %v697
        %699 = vdwg.mxu0
        %v700 = vld [vmem:[%s2] sm:$0x1]
        %v701 = vld [vmem:[%s3] sm:$0x1]
        %702 = vadd.xlane.f32.xlu0 %v618
        %v703 = vpop.xlane.xlu0 %702
        %v704 = vrcp.pop 128.0
        %v705 = vmul.f32 128.0, %v704
        %v706 = vsub.f32 1.0, %v705
        %v707 = vmul.f32 %v704, %v706
        %v708 = vadd.f32 %v704, %v707
        %vm709 = vweird.f32 %v704
        %v710 = vsel %vm709, %v704, %v708
        %v711 = vmul.f32 %v703, %v710
        %v712 = vsub.f32 %v618, %v711
        %v713 = vmul.f32 %v712, %v712
        %714 = vadd.xlane.f32.xlu0 %v713
        %v715 = vpop.xlane.xlu0 %714
        %v716 = vmul.f32 %v715, %v710
        %v717 = vadd.f32 %v716, 1e-05
        %v718 = vrsqrt.pop %v717
        %v719 = vmul.f32 %v718, %v717
        %v720 = vmul.f32 %v719, %v718
        %v721 = vmul.f32 0.5, %v720
        %v722 = vsub.f32 1.5, %v721
        %v723 = vmul.f32 %v718, %v722
        %vm724 = vweird.f32 %v717
        %vm725 = vweird.f32 %v718
        %vm726 = vmor %vm724, %vm725
        %v727 = vsel %vm726, %v718, %v723
        %v728 = vmul.f32 %v712, %v727
        %v730 = vperm.slane %v700, 0
        %v732 = vmul.f32 %v728, %v730
        %v734 = vperm.slane %v701, 0
        %v736 = vadd.f32 %v732, %v734
        %v737 = vld [vmem:[%s4] sm:$0x1]
        %v738 = vld [vmem:[%s5] sm:$0x1]
        %vm739 = vcmask 523264
        %v740 = vsel %vm739, %v698, 0.0
        %741 = vadd.xlane.f32.xlu0 %v740
        %v742 = vpop.xlane.xlu0 %741
        %v743 = vrcp.pop 64.0
        %v744 = vmul.f32 64.0, %v743
        %v745 = vsub.f32 1.0, %v744
        %v746 = vmul.f32 %v743, %v745
        %v747 = vadd.f32 %v743, %v746
        %vm748 = vweird.f32 %v743
        %v749 = vsel %vm748, %v743, %v747
        %v750 = vmul.f32 %v742, %v749
        %v751 = vsub.f32 %v698, %v750
        %v752 = vmul.f32 %v751, %v751
        %v753 = vsel %vm739, %v752, 0.0
        %754 = vadd.xlane.f32.xlu0 %v753
        %v755 = vpop.xlane.xlu0 %754
        %v756 = vmul.f32 %v755, %v749
        %v757 = vadd.f32 %v756, 1e-05
        %v758 = vrsqrt.pop %v757
        %v759 = vmul.f32 %v758, %v757
        %v760 = vmul.f32 %v759, %v758
        %v761 = vmul.f32 0.5, %v760
        %v762 = vsub.f32 1.5, %v761
        %v763 = vmul.f32 %v758, %v762
        %vm764 = vweird.f32 %v757
        %vm765 = vweird.f32 %v758
        %vm766 = vmor %vm764, %vm765
        %v767 = vsel %vm766, %v758, %v763
        %v768 = vmul.f32 %v751, %v767
        %v770 = vperm.slane %v737, 0
        %v772 = vmul.f32 %v768, %v770
        %v774 = vperm.slane %v738, 0
        %v776 = vadd.f32 %v772, %v774
        %v777 = vld [vmem:[%s6] sm:$0xff]
        %v778 = vld [vmem:[%s6 + $0x8] sm:$0xff]
        %v779 = vld [vmem:[%s6 + $0x10] sm:$0xff]
        %v780 = vld [vmem:[%s6 + $0x18] sm:$0xff]
        %v781 = vld [vmem:[%s6 + $0x20] sm:$0xff]
        %v782 = vld [vmem:[%s6 + $0x28] sm:$0xff]
        %v783 = vld [vmem:[%s6 + $0x30] sm:$0xff]
        %v784 = vld [vmem:[%s6 + $0x38] sm:$0xff]
        %v785 = vld [vmem:[%s6 + $0x40] sm:$0xff]
        %v786 = vld [vmem:[%s6 + $0x48] sm:$0xff]
        %v787 = vld [vmem:[%s6 + $0x50] sm:$0xff]
        %v788 = vld [vmem:[%s6 + $0x58] sm:$0xff]
        %v789 = vld [vmem:[%s6 + $0x60] sm:$0xff]
        %v790 = vld [vmem:[%s6 + $0x68] sm:$0xff]
        %v791 = vld [vmem:[%s6 + $0x70] sm:$0xff]
        %v792 = vld [vmem:[%s6 + $0x78] sm:$0xff]
        %v793 = vld [vmem:[%s6 + $0x80] sm:$0xff]
        %v794 = vld [vmem:[%s6 + $0x88] sm:$0xff]
        %v795 = vld [vmem:[%s6 + $0x90] sm:$0xff]
        %v796 = vld [vmem:[%s6 + $0x98] sm:$0xff]
        %v797 = vld [vmem:[%s6 + $0xa0] sm:$0xff]
        %v798 = vld [vmem:[%s6 + $0xa8] sm:$0xff]
        %v799 = vld [vmem:[%s6 + $0xb0] sm:$0xff]
        %v800 = vld [vmem:[%s6 + $0xb8] sm:$0xff]
        %v801 = vld [vmem:[%s6 + $0xc0] sm:$0xff]
        %v802 = vld [vmem:[%s6 + $0xc8] sm:$0xff]
        %v803 = vld [vmem:[%s6 + $0xd0] sm:$0xff]
        %v804 = vld [vmem:[%s6 + $0xd8] sm:$0xff]
        %v805 = vld [vmem:[%s6 + $0xe0] sm:$0xff]
        %v806 = vld [vmem:[%s6 + $0xe8] sm:$0xff]
        %v807 = vld [vmem:[%s6 + $0xf0] sm:$0xff]
        %v808 = vld [vmem:[%s6 + $0xf8] sm:$0xff]
        %v809 = vld [vmem:[%s6 + $0x100] sm:$0xff]
        %v810 = vld [vmem:[%s6 + $0x108] sm:$0xff]
        %v811 = vld [vmem:[%s6 + $0x110] sm:$0xff]
        %v812 = vld [vmem:[%s6 + $0x118] sm:$0xff]
        %v813 = vld [vmem:[%s6 + $0x120] sm:$0xff]
        %v814 = vld [vmem:[%s6 + $0x128] sm:$0xff]
        %v815 = vld [vmem:[%s6 + $0x130] sm:$0xff]
        %v816 = vld [vmem:[%s6 + $0x138] sm:$0xff]
        %v817 = vld [vmem:[%s6 + $0x140] sm:$0xff]
        %v818 = vld [vmem:[%s6 + $0x148] sm:$0xff]
        %v819 = vld [vmem:[%s6 + $0x150] sm:$0xff]
        %v820 = vld [vmem:[%s6 + $0x158] sm:$0xff]
        %v821 = vld [vmem:[%s6 + $0x160] sm:$0xff]
        %v822 = vld [vmem:[%s6 + $0x168] sm:$0xff]
        %v823 = vld [vmem:[%s6 + $0x170] sm:$0xff]
        %v824 = vld [vmem:[%s6 + $0x178] sm:$0xff]
        %v825 = vld [vmem:[%s6 + $0x180] sm:$0xff]
        %v826 = vld [vmem:[%s6 + $0x188] sm:$0xff]
        %v827 = vld [vmem:[%s6 + $0x190] sm:$0xff]
        %v828 = vld [vmem:[%s6 + $0x198] sm:$0xff]
        %v829 = vld [vmem:[%s6 + $0x1a0] sm:$0xff]
        %v830 = vld [vmem:[%s6 + $0x1a8] sm:$0xff]
        %v831 = vld [vmem:[%s6 + $0x1b0] sm:$0xff]
        %v832 = vld [vmem:[%s6 + $0x1b8] sm:$0xff]
        %v833 = vld [vmem:[%s6 + $0x1c0] sm:$0xff]
        %v834 = vld [vmem:[%s6 + $0x1c8] sm:$0xff]
        %v835 = vld [vmem:[%s6 + $0x1d0] sm:$0xff]
        %v836 = vld [vmem:[%s6 + $0x1d8] sm:$0xff]
        %v837 = vld [vmem:[%s6 + $0x1e0] sm:$0xff]
        %v838 = vld [vmem:[%s6 + $0x1e8] sm:$0xff]
        %v839 = vld [vmem:[%s6 + $0x1f0] sm:$0xff]
        %v840 = vld [vmem:[%s6 + $0x1f8] sm:$0xff]
        %841 = vmatpush.msra.mxu0 %v837
        %842 = vmatpush.msra.mxu0 %v833
        %843 = vmatpush.msra.mxu0 %v829
        %844 = vmatpush.msra.mxu0 %v825
        %845 = vmatpush.msra.mxu0 %v821
        %846 = vmatpush.msra.mxu0 %v817
        %847 = vmatpush.msra.mxu0 %v813
        %848 = vmatpush.msra.mxu0 %v809
        %849 = vmatpush.msra.mxu0 %v805
        %850 = vmatpush.msra.mxu0 %v801
        %851 = vmatpush.msra.mxu0 %v797
        %852 = vmatpush.msra.mxu0 %v793
        %853 = vmatpush.msra.mxu0 %v789
        %854 = vmatpush.msra.mxu0 %v785
        %855 = vmatpush.msra.mxu0 %v781
        %856 = vmatpush.msra.mxu0 %v777
        %857 = vmatmul.f32.gmra.mxu0 %v736
        %v858 = vpop.f32.mrf.mxu0
        %v859 = vadd.f32 0.0, %v858
        %860 = vdwg.mxu0
        %861 = vmatpush.msra.mxu0 %v838
        %862 = vmatpush.msra.mxu0 %v834
        %863 = vmatpush.msra.mxu0 %v830
        %864 = vmatpush.msra.mxu0 %v826
        %865 = vmatpush.msra.mxu0 %v822
        %866 = vmatpush.msra.mxu0 %v818
        %867 = vmatpush.msra.mxu0 %v814
        %868 = vmatpush.msra.mxu0 %v810
        %869 = vmatpush.msra.mxu0 %v806
        %870 = vmatpush.msra.mxu0 %v802
        %871 = vmatpush.msra.mxu0 %v798
        %872 = vmatpush.msra.mxu0 %v794
        %873 = vmatpush.msra.mxu0 %v790
        %874 = vmatpush.msra.mxu0 %v786
        %875 = vmatpush.msra.mxu0 %v782
        %876 = vmatpush.msra.mxu0 %v778
        %877 = vmatmul.f32.gmra.mxu0 %v736
        %v878 = vpop.f32.mrf.mxu0
        %v879 = vadd.f32 0.0, %v878
        %880 = vdwg.mxu0
        %881 = vmatpush.msra.mxu0 %v839
        %882 = vmatpush.msra.mxu0 %v835
        %883 = vmatpush.msra.mxu0 %v831
        %884 = vmatpush.msra.mxu0 %v827
        %885 = vmatpush.msra.mxu0 %v823
        %886 = vmatpush.msra.mxu0 %v819
        %887 = vmatpush.msra.mxu0 %v815
        %888 = vmatpush.msra.mxu0 %v811
        %889 = vmatpush.msra.mxu0 %v807
        %890 = vmatpush.msra.mxu0 %v803
        %891 = vmatpush.msra.mxu0 %v799
        %892 = vmatpush.msra.mxu0 %v795
        %893 = vmatpush.msra.mxu0 %v791
        %894 = vmatpush.msra.mxu0 %v787
        %895 = vmatpush.msra.mxu0 %v783
        %896 = vmatpush.msra.mxu0 %v779
        %897 = vmatmul.f32.gmra.mxu0 %v736
        %v898 = vpop.f32.mrf.mxu0
        %v899 = vadd.f32 0.0, %v898
        %900 = vdwg.mxu0
        %901 = vmatpush.msra.mxu0 %v840
        %902 = vmatpush.msra.mxu0 %v836
        %903 = vmatpush.msra.mxu0 %v832
        %904 = vmatpush.msra.mxu0 %v828
        %905 = vmatpush.msra.mxu0 %v824
        %906 = vmatpush.msra.mxu0 %v820
        %907 = vmatpush.msra.mxu0 %v816
        %908 = vmatpush.msra.mxu0 %v812
        %909 = vmatpush.msra.mxu0 %v808
        %910 = vmatpush.msra.mxu0 %v804
        %911 = vmatpush.msra.mxu0 %v800
        %912 = vmatpush.msra.mxu0 %v796
        %913 = vmatpush.msra.mxu0 %v792
        %914 = vmatpush.msra.mxu0 %v788
        %915 = vmatpush.msra.mxu0 %v784
        %916 = vmatpush.msra.mxu0 %v780
        %917 = vmatmul.f32.gmra.mxu0 %v736
        %v918 = vpop.f32.mrf.mxu0
        %v919 = vadd.f32 0.0, %v918
        %920 = vdwg.mxu0
        %v921 = vmul.f32 %v859, 0.088388346
        %v922 = vmul.f32 %v879, 0.088388346
        %v923 = vmul.f32 %v899, 0.088388346
        %v924 = vmul.f32 %v919, 0.088388346
        %v925 = vld [vmem:[%s7] sm:$0xff]
        %v926 = vld [vmem:[%s7 + $0x8] sm:$0xff]
        %v927 = vld [vmem:[%s7 + $0x10] sm:$0xff]
        %v928 = vld [vmem:[%s7 + $0x18] sm:$0xff]
        %v929 = vld [vmem:[%s7 + $0x20] sm:$0xff]
        %v930 = vld [vmem:[%s7 + $0x28] sm:$0xff]
        %v931 = vld [vmem:[%s7 + $0x30] sm:$0xff]
        %v932 = vld [vmem:[%s7 + $0x38] sm:$0xff]
        %v933 = vld [vmem:[%s7 + $0x40] sm:$0xff]
        %v934 = vld [vmem:[%s7 + $0x48] sm:$0xff]
        %v935 = vld [vmem:[%s7 + $0x50] sm:$0xff]
        %v936 = vld [vmem:[%s7 + $0x58] sm:$0xff]
        %v937 = vld [vmem:[%s7 + $0x60] sm:$0xff]
        %v938 = vld [vmem:[%s7 + $0x68] sm:$0xff]
        %v939 = vld [vmem:[%s7 + $0x70] sm:$0xff]
        %v940 = vld [vmem:[%s7 + $0x78] sm:$0xff]
        %v941 = vld [vmem:[%s7 + $0x80] sm:$0xff]
        %v942 = vld [vmem:[%s7 + $0x88] sm:$0xff]
        %v943 = vld [vmem:[%s7 + $0x90] sm:$0xff]
        %v944 = vld [vmem:[%s7 + $0x98] sm:$0xff]
        %v945 = vld [vmem:[%s7 + $0xa0] sm:$0xff]
        %v946 = vld [vmem:[%s7 + $0xa8] sm:$0xff]
        %v947 = vld [vmem:[%s7 + $0xb0] sm:$0xff]
        %v948 = vld [vmem:[%s7 + $0xb8] sm:$0xff]
        %v949 = vld [vmem:[%s7 + $0xc0] sm:$0xff]
        %v950 = vld [vmem:[%s7 + $0xc8] sm:$0xff]
        %v951 = vld [vmem:[%s7 + $0xd0] sm:$0xff]
        %v952 = vld [vmem:[%s7 + $0xd8] sm:$0xff]
        %v953 = vld [vmem:[%s7 + $0xe0] sm:$0xff]
        %v954 = vld [vmem:[%s7 + $0xe8] sm:$0xff]
        %v955 = vld [vmem:[%s7 + $0xf0] sm:$0xff]
        %v956 = vld [vmem:[%s7 + $0xf8] sm:$0xff]
        %v957 = vld [vmem:[%s7 + $0x100] sm:$0xff]
        %v958 = vld [vmem:[%s7 + $0x108] sm:$0xff]
        %v959 = vld [vmem:[%s7 + $0x110] sm:$0xff]
        %v960 = vld [vmem:[%s7 + $0x118] sm:$0xff]
        %v961 = vld [vmem:[%s7 + $0x120] sm:$0xff]
        %v962 = vld [vmem:[%s7 + $0x128] sm:$0xff]
        %v963 = vld [vmem:[%s7 + $0x130] sm:$0xff]
        %v964 = vld [vmem:[%s7 + $0x138] sm:$0xff]
        %v965 = vld [vmem:[%s7 + $0x140] sm:$0xff]
        %v966 = vld [vmem:[%s7 + $0x148] sm:$0xff]
        %v967 = vld [vmem:[%s7 + $0x150] sm:$0xff]
        %v968 = vld [vmem:[%s7 + $0x158] sm:$0xff]
        %v969 = vld [vmem:[%s7 + $0x160] sm:$0xff]
        %v970 = vld [vmem:[%s7 + $0x168] sm:$0xff]
        %v971 = vld [vmem:[%s7 + $0x170] sm:$0xff]
        %v972 = vld [vmem:[%s7 + $0x178] sm:$0xff]
        %v973 = vld [vmem:[%s7 + $0x180] sm:$0xff]
        %v974 = vld [vmem:[%s7 + $0x188] sm:$0xff]
        %v975 = vld [vmem:[%s7 + $0x190] sm:$0xff]
        %v976 = vld [vmem:[%s7 + $0x198] sm:$0xff]
        %v977 = vld [vmem:[%s7 + $0x1a0] sm:$0xff]
        %v978 = vld [vmem:[%s7 + $0x1a8] sm:$0xff]
        %v979 = vld [vmem:[%s7 + $0x1b0] sm:$0xff]
        %v980 = vld [vmem:[%s7 + $0x1b8] sm:$0xff]
        %v981 = vld [vmem:[%s7 + $0x1c0] sm:$0xff]
        %v982 = vld [vmem:[%s7 + $0x1c8] sm:$0xff]
        %v983 = vld [vmem:[%s7 + $0x1d0] sm:$0xff]
        %v984 = vld [vmem:[%s7 + $0x1d8] sm:$0xff]
        %v985 = vld [vmem:[%s7 + $0x1e0] sm:$0xff]
        %v986 = vld [vmem:[%s7 + $0x1e8] sm:$0xff]
        %v987 = vld [vmem:[%s7 + $0x1f0] sm:$0xff]
        %v988 = vld [vmem:[%s7 + $0x1f8] sm:$0xff]
        %v990 = vsel %vm739, %v776, 0
        %992 = vmatpush.msra.mxu0 0.0
        %993 = vmatpush.msra.mxu0 0.0
        %994 = vmatpush.msra.mxu0 0.0
        %995 = vmatpush.msra.mxu0 0.0
        %996 = vmatpush.msra.mxu0 0.0
        %997 = vmatpush.msra.mxu0 0.0
        %998 = vmatpush.msra.mxu0 0.0
        %999 = vmatpush.msra.mxu0 0.0
        %1000 = vmatpush.msra.mxu0 %v981
        %1001 = vmatpush.msra.mxu0 %v973
        %1002 = vmatpush.msra.mxu0 %v965
        %1003 = vmatpush.msra.mxu0 %v957
        %1004 = vmatpush.msra.mxu0 %v949
        %1005 = vmatpush.msra.mxu0 %v941
        %1006 = vmatpush.msra.mxu0 %v933
        %1007 = vmatpush.msra.mxu0 %v925
        %1008 = vmatmul.f32.gmra.mxu0 %v990
        %v1009 = vpop.f32.mrf.mxu0
        %v1010 = vadd.f32 0.0, %v1009
        %1011 = vdwg.mxu0
        %1012 = vmatpush.msra.mxu0 0.0
        %1013 = vmatpush.msra.mxu0 0.0
        %1014 = vmatpush.msra.mxu0 0.0
        %1015 = vmatpush.msra.mxu0 0.0
        %1016 = vmatpush.msra.mxu0 0.0
        %1017 = vmatpush.msra.mxu0 0.0
        %1018 = vmatpush.msra.mxu0 0.0
        %1019 = vmatpush.msra.mxu0 0.0
        %1020 = vmatpush.msra.mxu0 %v982
        %1021 = vmatpush.msra.mxu0 %v974
        %1022 = vmatpush.msra.mxu0 %v966
        %1023 = vmatpush.msra.mxu0 %v958
        %1024 = vmatpush.msra.mxu0 %v950
        %1025 = vmatpush.msra.mxu0 %v942
        %1026 = vmatpush.msra.mxu0 %v934
        %1027 = vmatpush.msra.mxu0 %v926
        %1028 = vmatmul.f32.gmra.mxu0 %v990
        %v1029 = vpop.f32.mrf.mxu0
        %v1030 = vadd.f32 0.0, %v1029
        %1031 = vdwg.mxu0
        %1032 = vmatpush.msra.mxu0 0.0
        %1033 = vmatpush.msra.mxu0 0.0
        %1034 = vmatpush.msra.mxu0 0.0
        %1035 = vmatpush.msra.mxu0 0.0
        %1036 = vmatpush.msra.mxu0 0.0
        %1037 = vmatpush.msra.mxu0 0.0
        %1038 = vmatpush.msra.mxu0 0.0
        %1039 = vmatpush.msra.mxu0 0.0
        %1040 = vmatpush.msra.mxu0 %v983
        %1041 = vmatpush.msra.mxu0 %v975
        %1042 = vmatpush.msra.mxu0 %v967
        %1043 = vmatpush.msra.mxu0 %v959
        %1044 = vmatpush.msra.mxu0 %v951
        %1045 = vmatpush.msra.mxu0 %v943
        %1046 = vmatpush.msra.mxu0 %v935
        %1047 = vmatpush.msra.mxu0 %v927
        %1048 = vmatmul.f32.gmra.mxu0 %v990
        %v1049 = vpop.f32.mrf.mxu0
        %v1050 = vadd.f32 0.0, %v1049
        %1051 = vdwg.mxu0
        %1052 = vmatpush.msra.mxu0 0.0
        %1053 = vmatpush.msra.mxu0 0.0
        %1054 = vmatpush.msra.mxu0 0.0
        %1055 = vmatpush.msra.mxu0 0.0
        %1056 = vmatpush.msra.mxu0 0.0
        %1057 = vmatpush.msra.mxu0 0.0
        %1058 = vmatpush.msra.mxu0 0.0
        %1059 = vmatpush.msra.mxu0 0.0
        %1060 = vmatpush.msra.mxu0 %v984
        %1061 = vmatpush.msra.mxu0 %v976
        %1062 = vmatpush.msra.mxu0 %v968
        %1063 = vmatpush.msra.mxu0 %v960
        %1064 = vmatpush.msra.mxu0 %v952
        %1065 = vmatpush.msra.mxu0 %v944
        %1066 = vmatpush.msra.mxu0 %v936
        %1067 = vmatpush.msra.mxu0 %v928
        %1068 = vmatmul.f32.gmra.mxu0 %v990
        %v1069 = vpop.f32.mrf.mxu0
        %v1070 = vadd.f32 0.0, %v1069
        %1071 = vdwg.mxu0
        %1072 = vmatpush.msra.mxu0 0.0
        %1073 = vmatpush.msra.mxu0 0.0
        %1074 = vmatpush.msra.mxu0 0.0
        %1075 = vmatpush.msra.mxu0 0.0
        %1076 = vmatpush.msra.mxu0 0.0
        %1077 = vmatpush.msra.mxu0 0.0
        %1078 = vmatpush.msra.mxu0 0.0
        %1079 = vmatpush.msra.mxu0 0.0
        %1080 = vmatpush.msra.mxu0 %v985
        %1081 = vmatpush.msra.mxu0 %v977
        %1082 = vmatpush.msra.mxu0 %v969
        %1083 = vmatpush.msra.mxu0 %v961
        %1084 = vmatpush.msra.mxu0 %v953
        %1085 = vmatpush.msra.mxu0 %v945
        %1086 = vmatpush.msra.mxu0 %v937
        %1087 = vmatpush.msra.mxu0 %v929
        %1088 = vmatmul.f32.gmra.mxu0 %v990
        %v1089 = vpop.f32.mrf.mxu0
        %v1090 = vadd.f32 0.0, %v1089
        %1091 = vdwg.mxu0
        %1092 = vmatpush.msra.mxu0 0.0
        %1093 = vmatpush.msra.mxu0 0.0
        %1094 = vmatpush.msra.mxu0 0.0
        %1095 = vmatpush.msra.mxu0 0.0
        %1096 = vmatpush.msra.mxu0 0.0
        %1097 = vmatpush.msra.mxu0 0.0
        %1098 = vmatpush.msra.mxu0 0.0
        %1099 = vmatpush.msra.mxu0 0.0
        %1100 = vmatpush.msra.mxu0 %v986
        %1101 = vmatpush.msra.mxu0 %v978
        %1102 = vmatpush.msra.mxu0 %v970
        %1103 = vmatpush.msra.mxu0 %v962
        %1104 = vmatpush.msra.mxu0 %v954
        %1105 = vmatpush.msra.mxu0 %v946
        %1106 = vmatpush.msra.mxu0 %v938
        %1107 = vmatpush.msra.mxu0 %v930
        %1108 = vmatmul.f32.gmra.mxu0 %v990
        %v1109 = vpop.f32.mrf.mxu0
        %v1110 = vadd.f32 0.0, %v1109
        %1111 = vdwg.mxu0
        %1112 = vmatpush.msra.mxu0 0.0
        %1113 = vmatpush.msra.mxu0 0.0
        %1114 = vmatpush.msra.mxu0 0.0
        %1115 = vmatpush.msra.mxu0 0.0
        %1116 = vmatpush.msra.mxu0 0.0
        %1117 = vmatpush.msra.mxu0 0.0
        %1118 = vmatpush.msra.mxu0 0.0
        %1119 = vmatpush.msra.mxu0 0.0
        %1120 = vmatpush.msra.mxu0 %v987
        %1121 = vmatpush.msra.mxu0 %v979
        %1122 = vmatpush.msra.mxu0 %v971
        %1123 = vmatpush.msra.mxu0 %v963
        %1124 = vmatpush.msra.mxu0 %v955
        %1125 = vmatpush.msra.mxu0 %v947
        %1126 = vmatpush.msra.mxu0 %v939
        %1127 = vmatpush.msra.mxu0 %v931
        %1128 = vmatmul.f32.gmra.mxu0 %v990
        %v1129 = vpop.f32.mrf.mxu0
        %v1130 = vadd.f32 0.0, %v1129
        %1131 = vdwg.mxu0
        %1132 = vmatpush.msra.mxu0 0.0
        %1133 = vmatpush.msra.mxu0 0.0
        %1134 = vmatpush.msra.mxu0 0.0
        %1135 = vmatpush.msra.mxu0 0.0
        %1136 = vmatpush.msra.mxu0 0.0
        %1137 = vmatpush.msra.mxu0 0.0
        %1138 = vmatpush.msra.mxu0 0.0
        %1139 = vmatpush.msra.mxu0 0.0
        %1140 = vmatpush.msra.mxu0 %v988
        %1141 = vmatpush.msra.mxu0 %v980
        %1142 = vmatpush.msra.mxu0 %v972
        %1143 = vmatpush.msra.mxu0 %v964
        %1144 = vmatpush.msra.mxu0 %v956
        %1145 = vmatpush.msra.mxu0 %v948
        %1146 = vmatpush.msra.mxu0 %v940
        %1147 = vmatpush.msra.mxu0 %v932
        %1148 = vmatmul.f32.gmra.mxu0 %v990
        %v1149 = vpop.f32.mrf.mxu0
        %v1150 = vadd.f32 0.0, %v1149
        %1151 = vdwg.mxu0
        %1152 = vst [vmem:[%s384] sm:$0xff] %v921
        %1153 = vst [vmem:[%s384 + $0x8] sm:$0xff] %v922
        %1154 = vst [vmem:[%s384 + $0x10] sm:$0xff] %v923
        %1155 = vst [vmem:[%s384 + $0x18] sm:$0xff] %v924
        %1156 = vst [vmem:[%s391] sm:$0xff] %v1010
        %1157 = vst [vmem:[%s391 + $0x8] sm:$0xff] %v1030
        %1158 = vst [vmem:[%s391 + $0x10] sm:$0xff] %v1050
        %1159 = vst [vmem:[%s391 + $0x18] sm:$0xff] %v1070
        %1160 = vst [vmem:[%s398] sm:$0xff] %v1090
        %1161 = vst [vmem:[%s398 + $0x8] sm:$0xff] %v1110
        %1162 = vst [vmem:[%s398 + $0x10] sm:$0xff] %v1130
        %1163 = vst [vmem:[%s398 + $0x18] sm:$0xff] %v1150
        %s1164 = sand.u32 %s225, 1
        %s1165 = scalar_lea.sflag [#allocation3], %s1164
        %s1166 = sand.u32 %s225, 1
        %s1167 = smul.addr %s1166, 32
        %s1168 = scalar_lea.vmem [#allocation2], %s1167
        %s1169 = sand.u32 %s28, 1
        %s1170 = scalar_lea.sflag [#allocation5], %s1169
        %s1171 = sand.u32 %s253, 1
        %s1172 = smul.addr %s1171, 32
        %s1173 = scalar_lea.vmem [#allocation4], %s1172
        %s1174 = sand.u32 %s28, 1
        %s1175 = scalar_lea.sflag [#allocation5], %s1174
        %s1176 = sand.u32 %s281, 1
        %s1177 = smul.addr %s1176, 32
        %s1178 = scalar_lea.vmem [#allocation6], %s1177
        // Predicated region
        $region53: #{tpu_custom_call.1} parent=51 // pred_check
          %p1179 = pneg %p235
        $region54: #{tpu_custom_call.1} parent=51 // pred_check_branch
          %1181 = sbr.rel (%p1179) target = $region56
        $region55: #{tpu_custom_call.1} parent=51 // pred_region
          %1183 = vsyncadd %s1165, 0
          %s1184 = smul.addr %s33, 4
          %s1185 = smul.addr %s32, 8
          %s1186 = sadd.s32 %s1184, %s1185
          %s1187 = smul.addr %s1186, 8
          %s1188 = scalar_lea.hbm %s8, %s1187
          %s1190 = sshll.u32 %s1168, 4
          %s1191 = int_to_ptr.vmem [resolvable:$true] %s1190
          %s1192 = sshll.u32 %s1188, 4
          %s1193 = int_to_ptr.hbm [resolvable:$true] %s1192
          %1195 = dma.vmem_to_hbm [thread:$0]  %s1191, 512, %s1193, %s1165
        $region56: #{tpu_custom_call.1} parent=51 // pred_fallthru
          _
        // Predicated region
        $region57: #{tpu_custom_call.1} parent=51 // pred_check
          %p1196 = pneg %p263
        $region58: #{tpu_custom_call.1} parent=51 // pred_check_branch
          %1198 = sbr.rel (%p1196) target = $region60
        $region59: #{tpu_custom_call.1} parent=51 // pred_region
          %1200 = vsyncadd %s1170, 0
          %s1201 = smul.addr %s33, 4
          %s1202 = smul.addr %s32, 8
          %s1203 = sadd.s32 %s1201, %s1202
          %s1204 = smul.addr %s1203, 8
          %s1205 = scalar_lea.hbm %s9, %s1204
          %s1207 = sshll.u32 %s1173, 4
          %s1208 = int_to_ptr.vmem [resolvable:$true] %s1207
          %s1209 = sshll.u32 %s1205, 4
          %s1210 = int_to_ptr.hbm [resolvable:$true] %s1209
          %1212 = dma.vmem_to_hbm [thread:$0]  %s1208, 512, %s1210, %s1170
        $region60: #{tpu_custom_call.1} parent=51 // pred_fallthru
          _
        // Predicated region
        $region61: #{tpu_custom_call.1} parent=51 // pred_check
          %p1213 = pneg %p291
        $region62: #{tpu_custom_call.1} parent=51 // pred_check_branch
          %1215 = sbr.rel (%p1213) target = $region64
        $region63: #{tpu_custom_call.1} parent=51 // pred_region
          %1217 = vsyncadd %s1175, 0
          %s1218 = smul.addr %s33, 4
          %s1219 = smul.addr %s32, 8
          %s1220 = sadd.s32 %s1218, %s1219
          %s1221 = smul.addr %s1220, 8
          %s1222 = scalar_lea.hbm %s10, %s1221
          %s1224 = sshll.u32 %s1178, 4
          %s1225 = int_to_ptr.vmem [resolvable:$true] %s1224
          %s1226 = sshll.u32 %s1222, 4
          %s1227 = int_to_ptr.hbm [resolvable:$true] %s1226
          %1229 = dma.vmem_to_hbm [thread:$0]  %s1225, 512, %s1227, %s1175
        $region64: #{tpu_custom_call.1} parent=51 // pred_fallthru
          _
      $region52: #{tpu_custom_call.1} parent=5 // pred_fallthru
        _
      %p1230 = scmp.le.s32.totalorder 2, %s23
      // Predicated region
      $region65: #{tpu_custom_call.1} parent=5 // pred_check
        %p1231 = pneg %p1230
      $region66: #{tpu_custom_call.1} parent=5 // pred_check_branch
        %1233 = sbr.rel (%p1231) target = $region68
      $region67: #{tpu_custom_call.1} parent=5 // pred_region
        %s1234 = ssub.s32 %s23, 2
        // Predicated region
        $region69: #{tpu_custom_call.1} parent=67 // pred_check
          %p1235 = pneg %p241
        $region70: #{tpu_custom_call.1} parent=67 // pred_check_branch
          %1237 = sbr.rel (%p1235) target = $region72
        $region71: #{tpu_custom_call.1} parent=67 // pred_region
          %s1238 = sand.u32 %s226, 1
          %s1239 = scalar_lea.sflag [#allocation3], %s1238
          %s1240 = sand.u32 %s226, 1
          %s1241 = smul.addr %s1240, 32
          %s1242 = scalar_lea.vmem [#allocation2], %s1241
          %1244 = dma.done %s1239, 512
        $region72: #{tpu_custom_call.1} parent=67 // pred_fallthru
          _
        // Predicated region
        $region73: #{tpu_custom_call.1} parent=67 // pred_check
          %p1245 = pneg %p269
        $region74: #{tpu_custom_call.1} parent=67 // pred_check_branch
          %1247 = sbr.rel (%p1245) target = $region76
        $region75: #{tpu_custom_call.1} parent=67 // pred_region
          %s1248 = sand.u32 %s29, 1
          %s1249 = scalar_lea.sflag [#allocation5], %s1248
          %s1250 = sand.u32 %s254, 1
          %s1251 = smul.addr %s1250, 32
          %s1252 = scalar_lea.vmem [#allocation4], %s1251
          %1254 = dma.done %s1249, 512
        $region76: #{tpu_custom_call.1} parent=67 // pred_fallthru
          _
        // Predicated region
        $region77: #{tpu_custom_call.1} parent=67 // pred_check
          %p1255 = pneg %p297
        $region78: #{tpu_custom_call.1} parent=67 // pred_check_branch
          %1257 = sbr.rel (%p1255) target = $region80
        $region79: #{tpu_custom_call.1} parent=67 // pred_region
          %s1258 = sand.u32 %s29, 1
          %s1259 = scalar_lea.sflag [#allocation5], %s1258
          %s1260 = sand.u32 %s282, 1
          %s1261 = smul.addr %s1260, 32
          %s1262 = scalar_lea.vmem [#allocation6], %s1261
          %1264 = dma.done %s1259, 512
        $region80: #{tpu_custom_call.1} parent=67 // pred_fallthru
          _
      $region68: #{tpu_custom_call.1} parent=5 // pred_fallthru
        _
    $region6: #{tpu_custom_call.1} parent=1 // loop_footer
      %s27 = sadd.s32 1, %s23
    $region7: #{tpu_custom_call.1} parent=1 // loop_footer_branch
      %22 = sbr.rel target = $region3
    $region8: #{tpu_custom_call.1} parent=1 // loop_exit
      _
    %1265 = vsyncpa [#allocation3], 1
    %s1266 = scalar_lea.sflag [#allocation3], 1
    %1267 = vsyncpa %s1266, 1
    %1268 = vsyncpa [#allocation5], 1
    %s1269 = scalar_lea.sflag [#allocation5], 1
    %1270 = vsyncpa %s1269, 1

</llo_original>
